<compile_context>
chip_gen: v7x
topology: tpu7x:2x2x1
jax: 0.10.0
libtpu: 0.0.40
codegen_flags: <defaults>
</compile_context>

<pallas_src>
import functools
import math

import jax
import jax.numpy as jnp
from jax.experimental import pallas as pl
from jax.experimental.pallas import tpu as pltpu


def _round_up(x, m):
    return ((x + m - 1) // m) * m


# --------------------------------------------------------------------------
# Pallas kernel 1: one-pass per-channel sum / sum-of-squares reduction
# --------------------------------------------------------------------------
def _bn_stats_kernel(x_ref, sum_ref, sq_ref):
    @pl.when(pl.program_id(0) == 0)
    def _():
        sum_ref[...] = jnp.zeros_like(sum_ref)
        sq_ref[...] = jnp.zeros_like(sq_ref)

    xv = x_ref[...]
    sum_ref[...] += jnp.sum(xv, axis=0, keepdims=True)
    sq_ref[...] += jnp.sum(xv * xv, axis=0, keepdims=True)


def _bn_batch_stats(x2d, count):
    """x2d: (M, C) f32.  Returns (mean, biased var) per channel, one pass."""
    M, C = x2d.shape
    TM = 1024 if M >= 1024 else _round_up(M, 8)
    Mp = _round_up(M, TM)
    if Mp != M:
        x2d = jnp.pad(x2d, ((0, Mp - M), (0, 0)))   # zero rows add 0 to both sums
    s, sq = pl.pallas_call(
        _bn_stats_kernel,
        out_shape=(jax.ShapeDtypeStruct((1, C), jnp.float32),
                   jax.ShapeDtypeStruct((1, C), jnp.float32)),
        grid_spec=pltpu.PrefetchScalarGridSpec(
            num_scalar_prefetch=0,
            grid=(Mp // TM,),
            in_specs=[pl.BlockSpec((TM, C), lambda i: (i, 0))],
            out_specs=(pl.BlockSpec((1, C), lambda i: (0, 0)),
                       pl.BlockSpec((1, C), lambda i: (0, 0))),
        ),
        compiler_params=pltpu.CompilerParams(dimension_semantics=("arbitrary",)),
    )(x2d)
    mean = s[0] / count
    var = jnp.maximum(sq[0] / count - mean * mean, 0.0)
    return mean, var


# --------------------------------------------------------------------------
# Pallas kernel 2: fused BN(scale,shift) + ReLU + grouped GEMM (MXU hot path)
# --------------------------------------------------------------------------
def _fused_bn_relu_gemm_kernel(a_ref, s_ref, t_ref, b_ref, o_ref):
    # a_ref: (TM, TK) raw activation patches, f32
    # s_ref/t_ref: (1, TK) per-K BN scale / shift, f32
    # b_ref: (TK, CO) conv weights, bf16
    # o_ref: (TM, CO) f32 -- resident across the K grid axis (accumulator)
    @pl.when(pl.program_id(2) == 0)
    def _():
        o_ref[...] = jnp.zeros_like(o_ref)

    a = jnp.maximum(a_ref[...] * s_ref[...] + t_ref[...], 0.0)   # BN + ReLU (VPU, f32)
    o_ref[...] += jnp.dot(a.astype(jnp.bfloat16), b_ref[...],
                          preferred_element_type=jnp.float32)


def _grouped_bn_relu_gemm(a, scale_k, shift_k, b):
    """a: (G, M, K) f32 raw patches; scale_k/shift_k: (G, 1, K) f32;
    b: (G, K, CO) bf16.  Returns (G, M, CO) f32 = relu(a*scale+shift) @ b."""
    G, M, K = a.shape
    CO = b.shape[-1]

    TM = 512 if M >= 512 else _round_up(M, 8)
    Mp = _round_up(M, TM)
    if K <= 512:                      # small K: one full-extent K block, no padding
        TK, Kp = K, K
    else:
        TK = 256
        Kp = _round_up(K, TK)

    if Mp != M:
        a = jnp.pad(a, ((0, 0), (0, Mp - M), (0, 0)))
    if Kp != K:
        a = jnp.pad(a, ((0, 0), (0, 0), (0, Kp - K)))
        scale_k = jnp.pad(scale_k, ((0, 0), (0, 0), (0, Kp - K)))
        shift_k = jnp.pad(shift_k, ((0, 0), (0, 0), (0, Kp - K)))
        b = jnp.pad(b, ((0, 0), (0, Kp - K), (0, 0)))

    grid = (G, Mp // TM, Kp // TK)
    out = pl.pallas_call(
        _fused_bn_relu_gemm_kernel,
        out_shape=jax.ShapeDtypeStruct((G, Mp, CO), jnp.float32),
        grid_spec=pltpu.PrefetchScalarGridSpec(
            num_scalar_prefetch=0,
            grid=grid,
            in_specs=[
                pl.BlockSpec((None, TM, TK), lambda g, i, k: (g, i, k)),
                pl.BlockSpec((None, 1, TK), lambda g, i, k: (g, 0, k)),
                pl.BlockSpec((None, 1, TK), lambda g, i, k: (g, 0, k)),
                pl.BlockSpec((None, TK, CO), lambda g, i, k: (g, k, 0)),
            ],
            out_specs=pl.BlockSpec((None, TM, CO), lambda g, i, k: (g, i, 0)),
        ),
        compiler_params=pltpu.CompilerParams(
            dimension_semantics=("parallel", "parallel", "arbitrary")),
    )(a, scale_k, shift_k, b)
    return out[:, :M, :]


# --------------------------------------------------------------------------
# BN_AC_CONV3D forward
# --------------------------------------------------------------------------
def bn_ac_conv3d(x, gamma, beta, w, *, kernel=(1, 1, 1), pad=(0, 0, 0),
                 stride=(1, 1, 1), groups=1, eps=1e-5):
    """Forward of the PyTorch BN_AC_CONV3D module.

    x: (N, C_in, T, H, W) f32 (NCDHW); gamma/beta: (C_in,);
    w: (C_out, C_in//groups, kt, kh, kw) (Conv3d weight, bias=False).
    BatchNorm uses training-mode batch statistics (fresh .train() module).
    Returns (N, C_out, To, Ho, Wo) f32.
    """
    N, Cin, T, H, W = x.shape
    Cout, cpg, kt, kh, kw = w.shape
    g = groups
    assert Cin == cpg * g and Cout % g == 0
    assert (kt, kh, kw) == tuple(kernel)
    co_pg = Cout // g
    st, sh, sw = stride
    pt, ph, pw = pad
    kvol = kt * kh * kw

    x_cl = jnp.transpose(x, (0, 2, 3, 4, 1))                    # (N,T,H,W,Cin)

    # ---- BN batch stats (one-pass Pallas reduction) -> folded affine
    mean, var = _bn_batch_stats(x_cl.reshape(-1, Cin), float(N * T * H * W))
    scale = gamma * jax.lax.rsqrt(var + eps)
    shift = beta - mean * scale

    # ---- conv padding of the RAW activation with the per-channel value that
    #      the fused affine+ReLU maps exactly to 0  (p = -shift/scale).
    if pt or ph or pw:
        # exact for scale != 0 (gamma != 0); gamma == 0 is a degenerate case.
        safe = jnp.where(scale == 0.0, 1.0, scale)
        p = jnp.where(scale == 0.0, 0.0, -shift / safe)
        x_pad = jnp.pad(x_cl - p,
                        ((0, 0), (pt, pt), (ph, ph), (pw, pw), (0, 0))) + p
    else:
        x_pad = x_cl

    Tp, Hp, Wp = T + 2 * pt, H + 2 * ph, W + 2 * pw
    To = (Tp - kt) // st + 1
    Ho = (Hp - kh) // sh + 1
    Wo = (Wp - kw) // sw + 1
    M = N * To * Ho * Wo

    # ---- im2col gather of the RAW activation; K order = (kvol, cin_per_group)
    if kvol == 1:
        patches = x_pad[:, ::st, ::sh, ::sw, :][..., None, :]    # (N,To,Ho,Wo,1,C)
    else:
        cols = []
        for dt in range(kt):
            for dh in range(kh):
                for dw in range(kw):
                    cols.append(x_pad[:,
                                      dt:dt + (To - 1) * st + 1:st,
                                      dh:dh + (Ho - 1) * sh + 1:sh,
                                      dw:dw + (Wo - 1) * sw + 1:sw, :])
        patches = jnp.stack(cols, axis=-2)                       # (N,To,Ho,Wo,kvol,C)

    K = kvol * cpg
    a = patches.reshape(M, kvol, g, cpg)
    a = jnp.transpose(a, (2, 0, 1, 3)).reshape(g, M, K)          # (g, M, K)

    # per-K BN scale/shift (per input channel, repeated across kvol)
    scale_k = jnp.broadcast_to(scale.reshape(g, 1, cpg),
                               (g, kvol, cpg)).reshape(g, 1, K)
    shift_k = jnp.broadcast_to(shift.reshape(g, 1, cpg),
                               (g, kvol, cpg)).reshape(g, 1, K)

    # weights -> (g, K, co_pg), bf16 operands for the MXU (f32 accumulation)
    b = w.reshape(g, co_pg, cpg, kvol)
    b = jnp.transpose(b, (0, 3, 2, 1)).reshape(g, K, co_pg).astype(jnp.bfloat16)

    out = _grouped_bn_relu_gemm(a, scale_k, shift_k, b)          # (g, M, co_pg)
    out = jnp.transpose(out, (1, 0, 2)).reshape(N, To, Ho, Wo, Cout)
    return jnp.transpose(out, (0, 4, 1, 2, 3))                   # back to NCDHW


# --------------------------------------------------------------------------
# plain-JAX reference (pure XLA) for a correctness check
# --------------------------------------------------------------------------
def _reference(x, gamma, beta, w, *, kernel, pad, stride, groups, eps=1e-5):
    mean = jnp.mean(x, axis=(0, 2, 3, 4))
    var = jnp.var(x, axis=(0, 2, 3, 4))                  # biased (train-mode norm)
    scale = gamma * jax.lax.rsqrt(var + eps)
    shift = beta - mean * scale
    h = jnp.maximum(x * scale[None, :, None, None, None]
                    + shift[None, :, None, None, None], 0.0)
    return jax.lax.conv_general_dilated(
        h, w, window_strides=stride,
        padding=[(pad[0], pad[0]), (pad[1], pad[1]), (pad[2], pad[2])],
        dimension_numbers=("NCDHW", "OIDHW", "NCDHW"),
        feature_group_count=groups)


# --------------------------------------------------------------------------
if __name__ == "__main__":
    key = jax.random.PRNGKey(0)
    N, T, H, W = 2, 8, 16, 16
    configs = [
        # module defaults: 1x1x1, ungrouped
        dict(num_in=32, num_filter=64, kernel=(1, 1, 1), pad=(0, 0, 0),
             stride=(1, 1, 1), groups=1),
        # MFNet-style grouped 3x3x3 with spatial stride
        dict(num_in=32, num_filter=64, kernel=(3, 3, 3), pad=(1, 1, 1),
             stride=(1, 2, 2), groups=4),
    ]

    for i, cfg in enumerate(configs):
        ks = jax.random.split(jax.random.fold_in(key, i), 4)
        Cin, Cout = cfg["num_in"], cfg["num_filter"]
        kt, kh, kw = cfg["kernel"]
        cpg = Cin // cfg["groups"]

        x = jax.random.normal(ks[0], (N, Cin, T, H, W), jnp.float32)
        gamma = 1.0 + 0.1 * jax.random.normal(ks[1], (Cin,), jnp.float32)
        beta = 0.1 * jax.random.normal(ks[2], (Cin,), jnp.float32)
        wgt = jax.random.normal(ks[3], (Cout, cpg, kt, kh, kw), jnp.float32)
        wgt = wgt / math.sqrt(cpg * kt * kh * kw)

        fwd = jax.jit(functools.partial(
            bn_ac_conv3d, kernel=cfg["kernel"], pad=cfg["pad"],
            stride=cfg["stride"], groups=cfg["groups"]))
        out = jax.block_until_ready(fwd(x, gamma, beta, wgt))

        ref = jax.block_until_ready(_reference(
            x, gamma, beta, wgt, kernel=cfg["kernel"], pad=cfg["pad"],
            stride=cfg["stride"], groups=cfg["groups"]))

        assert out.shape == ref.shape, (out.shape, ref.shape)
        err = float(jnp.max(jnp.abs(out - ref)))
        assert err < 5e-2, f"config {i}: max abs err {err}"

    print("KERNEL_OK")
</pallas_src>

<mosaic_0001>
module attributes {stable_mosaic.version = 11 : i64} {
  func.func @_bn_stats_kernel(%arg0: i32, %arg1: memref<1024x32xf32, #tpu.memory_space<vmem>>, %arg2: memref<1x32xf32, #tpu.memory_space<vmem>>, %arg3: memref<1x32xf32, #tpu.memory_space<vmem>>) attributes {dimension_semantics = [#tpu.dimension_semantics<arbitrary>], iteration_bounds = array<i64: 4>, scalar_prefetch = 0 : i64, scratch_operands = 0 : i64, tpu.core_type = #tpu.core_type<tc>, window_params = [{transform_indices = @transform_0, window_bounds = array<i64: 1024, 32>}, {pipeline_mode = #tpu.pipeline_mode<synchronous>, transform_indices = @transform_1, window_bounds = array<i64: 1, 32>}, {pipeline_mode = #tpu.pipeline_mode<synchronous>, transform_indices = @transform_2, window_bounds = array<i64: 1, 32>}]} {
    %c0_i32 = arith.constant 0 : i32
    %0 = arith.cmpi eq, %arg0, %c0_i32 : i32
    %1 = arith.extui %0 : i1 to i32
    %c0_i32_0 = arith.constant 0 : i32
    %2 = arith.cmpi ne, %1, %c0_i32_0 : i32
    scf.if %2 {
      %cst_11 = arith.constant 0.000000e+00 : f32
      %15 = vector.broadcast %cst_11 : f32 to vector<1x32xf32>
      %c0_12 = arith.constant 0 : index
      %c0_13 = arith.constant 0 : index
      %16 = vector.load %arg2[%c0_12, %c0_13] : memref<1x32xf32, #tpu.memory_space<vmem>>, vector<1x32xf32>
      tpu.vector_store %arg2[%c0_12, %c0_13], %15 {strides = array<i32>} : memref<1x32xf32, #tpu.memory_space<vmem>>, vector<1x32xf32>,
      %cst_14 = arith.constant 0.000000e+00 : f32
      %17 = vector.broadcast %cst_14 : f32 to vector<1x32xf32>
      %c0_15 = arith.constant 0 : index
      %c0_16 = arith.constant 0 : index
      %18 = vector.load %arg3[%c0_15, %c0_16] : memref<1x32xf32, #tpu.memory_space<vmem>>, vector<1x32xf32>
      tpu.vector_store %arg3[%c0_15, %c0_16], %17 {strides = array<i32>} : memref<1x32xf32, #tpu.memory_space<vmem>>, vector<1x32xf32>,
    } else {
    }
    %c0 = arith.constant 0 : index
    %c0_1 = arith.constant 0 : index
    %3 = vector.load %arg1[%c0, %c0_1] : memref<1024x32xf32, #tpu.memory_space<vmem>>, vector<1024x32xf32>
    %c0_2 = arith.constant 0 : index
    %c0_3 = arith.constant 0 : index
    %4 = vector.load %arg2[%c0_2, %c0_3] : memref<1x32xf32, #tpu.memory_space<vmem>>, vector<1x32xf32>
    %cst = arith.constant dense<0.000000e+00> : vector<32xf32>
    %5 = vector.multi_reduction <add>, %3, %cst [0] : vector<1024x32xf32> to vector<32xf32>
    %6 = vector.shape_cast %5 : vector<32xf32> to vector<1x32xf32>
    %7 = arith.addf %4, %6 : vector<1x32xf32>
    %c0_4 = arith.constant 0 : index
    %c0_5 = arith.constant 0 : index
    %8 = vector.load %arg2[%c0_4, %c0_5] : memref<1x32xf32, #tpu.memory_space<vmem>>, vector<1x32xf32>
    tpu.vector_store %arg2[%c0_4, %c0_5], %7 {strides = array<i32>} : memref<1x32xf32, #tpu.memory_space<vmem>>, vector<1x32xf32>,
    %c0_6 = arith.constant 0 : index
    %c0_7 = arith.constant 0 : index
    %9 = vector.load %arg3[%c0_6, %c0_7] : memref<1x32xf32, #tpu.memory_space<vmem>>, vector<1x32xf32>
    %10 = arith.mulf %3, %3 : vector<1024x32xf32>
    %cst_8 = arith.constant dense<0.000000e+00> : vector<32xf32>
    %11 = vector.multi_reduction <add>, %10, %cst_8 [0] : vector<1024x32xf32> to vector<32xf32>
    %12 = vector.shape_cast %11 : vector<32xf32> to vector<1x32xf32>
    %13 = arith.addf %9, %12 : vector<1x32xf32>
    %c0_9 = arith.constant 0 : index
    %c0_10 = arith.constant 0 : index
    %14 = vector.load %arg3[%c0_9, %c0_10] : memref<1x32xf32, #tpu.memory_space<vmem>>, vector<1x32xf32>
    tpu.vector_store %arg3[%c0_9, %c0_10], %13 {strides = array<i32>} : memref<1x32xf32, #tpu.memory_space<vmem>>, vector<1x32xf32>,
    return
  }
  func.func @transform_0(%arg0: i32) -> (i32, i32) {
    %c0_i32 = arith.constant 0 : i32
    %c0_i32_0 = arith.constant 0 : i32
    return %arg0, %c0_i32 : i32, i32
  }
  func.func @transform_1(%arg0: i32) -> (i32, i32) {
    %c0_i32 = arith.constant 0 : i32
    %c0_i32_0 = arith.constant 0 : i32
    %c0_i32_1 = arith.constant 0 : i32
    return %c0_i32, %c0_i32_0 : i32, i32
  }
  func.func @transform_2(%arg0: i32) -> (i32, i32) {
    %c0_i32 = arith.constant 0 : i32
    %c0_i32_0 = arith.constant 0 : i32
    %c0_i32_1 = arith.constant 0 : i32
    return %c0_i32, %c0_i32_0 : i32, i32
  }
}

module attributes {stable_mosaic.version = 11 : i64} {
  func.func @_fused_bn_relu_gemm_kernel(%arg0: i32, %arg1: i32, %arg2: i32, %arg3: memref<1x512x32xf32, #tpu.memory_space<vmem>>, %arg4: memref<1x1x32xf32, #tpu.memory_space<vmem>>, %arg5: memref<1x1x32xf32, #tpu.memory_space<vmem>>, %arg6: memref<1x32x64xbf16, #tpu.memory_space<vmem>>, %arg7: memref<1x512x64xf32, #tpu.memory_space<vmem>>) attributes {dimension_semantics = [#tpu.dimension_semantics<parallel>, #tpu.dimension_semantics<parallel>, #tpu.dimension_semantics<arbitrary>], iteration_bounds = array<i64: 1, 8, 1>, scalar_prefetch = 0 : i64, scratch_operands = 0 : i64, tpu.core_type = #tpu.core_type<tc>, window_params = [{transform_indices = @transform_0, window_bounds = array<i64: 1, 512, 32>}, {transform_indices = @transform_1, window_bounds = array<i64: 1, 1, 32>}, {transform_indices = @transform_2, window_bounds = array<i64: 1, 1, 32>}, {transform_indices = @transform_3, window_bounds = array<i64: 1, 32, 64>}, {transform_indices = @transform_4, window_bounds = array<i64: 1, 512, 64>}]} {
    %c0_i32 = arith.constant 0 : i32
    %0 = arith.cmpi eq, %arg2, %c0_i32 : i32
    %1 = arith.extui %0 : i1 to i32
    %c0_i32_0 = arith.constant 0 : i32
    %2 = arith.cmpi ne, %1, %c0_i32_0 : i32
    scf.if %2 {
      %cst_19 = arith.constant 0.000000e+00 : f32
      %25 = vector.broadcast %cst_19 : f32 to vector<512x64xf32>
      %c0_20 = arith.constant 0 : index
      %c0_21 = arith.constant 0 : index
      %c0_22 = arith.constant 0 : index
      %26 = vector.load %arg7[%c0_20, %c0_21, %c0_22] : memref<1x512x64xf32, #tpu.memory_space<vmem>>, vector<1x512x64xf32>
      %27 = vector.shape_cast %26 : vector<1x512x64xf32> to vector<512x64xf32>
      %28 = vector.shape_cast %25 : vector<512x64xf32> to vector<1x512x64xf32>
      tpu.vector_store %arg7[%c0_20, %c0_21, %c0_22], %28 {strides = array<i32>} : memref<1x512x64xf32, #tpu.memory_space<vmem>>, vector<1x512x64xf32>,
    } else {
    }
    %c0 = arith.constant 0 : index
    %c0_1 = arith.constant 0 : index
    %c0_2 = arith.constant 0 : index
    %3 = vector.load %arg3[%c0, %c0_1, %c0_2] : memref<1x512x32xf32, #tpu.memory_space<vmem>>, vector<1x512x32xf32>
    %4 = vector.shape_cast %3 : vector<1x512x32xf32> to vector<512x32xf32>
    %c0_3 = arith.constant 0 : index
    %c0_4 = arith.constant 0 : index
    %c0_5 = arith.constant 0 : index
    %5 = vector.load %arg4[%c0_3, %c0_4, %c0_5] : memref<1x1x32xf32, #tpu.memory_space<vmem>>, vector<1x1x32xf32>
    %6 = vector.shape_cast %5 : vector<1x1x32xf32> to vector<1x32xf32>
    %7 = vector.broadcast %6 : vector<1x32xf32> to vector<512x32xf32>
    %8 = arith.mulf %4, %7 : vector<512x32xf32>
    %c0_6 = arith.constant 0 : index
    %c0_7 = arith.constant 0 : index
    %c0_8 = arith.constant 0 : index
    %9 = vector.load %arg5[%c0_6, %c0_7, %c0_8] : memref<1x1x32xf32, #tpu.memory_space<vmem>>, vector<1x1x32xf32>
    %10 = vector.shape_cast %9 : vector<1x1x32xf32> to vector<1x32xf32>
    %11 = vector.broadcast %10 : vector<1x32xf32> to vector<512x32xf32>
    %12 = arith.addf %8, %11 : vector<512x32xf32>
    %cst = arith.constant 0.000000e+00 : f32
    %13 = vector.broadcast %cst : f32 to vector<512x32xf32>
    %14 = arith.maximumf %12, %13 : vector<512x32xf32>
    %c0_9 = arith.constant 0 : index
    %c0_10 = arith.constant 0 : index
    %c0_11 = arith.constant 0 : index
    %15 = vector.load %arg7[%c0_9, %c0_10, %c0_11] : memref<1x512x64xf32, #tpu.memory_space<vmem>>, vector<1x512x64xf32>
    %16 = vector.shape_cast %15 : vector<1x512x64xf32> to vector<512x64xf32>
    %17 = arith.truncf %14 : vector<512x32xf32> to vector<512x32xbf16>
    %c0_12 = arith.constant 0 : index
    %c0_13 = arith.constant 0 : index
    %c0_14 = arith.constant 0 : index
    %18 = vector.load %arg6[%c0_12, %c0_13, %c0_14] : memref<1x32x64xbf16, #tpu.memory_space<vmem>>, vector<1x32x64xbf16>
    %19 = vector.shape_cast %18 : vector<1x32x64xbf16> to vector<32x64xbf16>
    %cst_15 = arith.constant dense<0.000000e+00> : vector<512x64xf32>
    %20 = tpu.matmul %17, %19, %cst_15 {dimension_numbers = #tpu.dot_dimension_numbers<[1], [0], [0], [1], [0, 0, 1, 1], [], []>} : vector<512x32xbf16>, vector<32x64xbf16>, vector<512x64xf32> -> vector<512x64xf32>
    %21 = arith.addf %16, %20 : vector<512x64xf32>
    %c0_16 = arith.constant 0 : index
    %c0_17 = arith.constant 0 : index
    %c0_18 = arith.constant 0 : index
    %22 = vector.load %arg7[%c0_16, %c0_17, %c0_18] : memref<1x512x64xf32, #tpu.memory_space<vmem>>, vector<1x512x64xf32>
    %23 = vector.shape_cast %22 : vector<1x512x64xf32> to vector<512x64xf32>
    %24 = vector.shape_cast %21 : vector<512x64xf32> to vector<1x512x64xf32>
    tpu.vector_store %arg7[%c0_16, %c0_17, %c0_18], %24 {strides = array<i32>} : memref<1x512x64xf32, #tpu.memory_space<vmem>>, vector<1x512x64xf32>,
    return
  }
  func.func @transform_0(%arg0: i32, %arg1: i32, %arg2: i32) -> (i32, i32, i32) {
    %c0_i32 = arith.constant 0 : i32
    return %arg0, %arg1, %arg2 : i32, i32, i32
  }
  func.func @transform_1(%arg0: i32, %arg1: i32, %arg2: i32) -> (i32, i32, i32) {
    %c0_i32 = arith.constant 0 : i32
    %c0_i32_0 = arith.constant 0 : i32
    return %arg0, %c0_i32, %arg2 : i32, i32, i32
  }
  func.func @transform_2(%arg0: i32, %arg1: i32, %arg2: i32) -> (i32, i32, i32) {
    %c0_i32 = arith.constant 0 : i32
    %c0_i32_0 = arith.constant 0 : i32
    return %arg0, %c0_i32, %arg2 : i32, i32, i32
  }
  func.func @transform_3(%arg0: i32, %arg1: i32, %arg2: i32) -> (i32, i32, i32) {
    %c0_i32 = arith.constant 0 : i32
    %c0_i32_0 = arith.constant 0 : i32
    return %arg0, %arg2, %c0_i32 : i32, i32, i32
  }
  func.func @transform_4(%arg0: i32, %arg1: i32, %arg2: i32) -> (i32, i32, i32) {
    %c0_i32 = arith.constant 0 : i32
    %c0_i32_0 = arith.constant 0 : i32
    return %arg0, %arg1, %c0_i32 : i32, i32, i32
  }
}

</mosaic_0001>

<llo_original>
// kernel: bn_ac_conv3d.2
$region0: #{bn_ac_conv3d.2}
  #allocation0 [shape = 'u32[]', space=smem, size = 0x4, offset = 0x4, fixed_abs, tag = 'smem constant byte address 0x4 - core index']
  #allocation1 [shape = 'u32[144,128]{1,0:T(1,128)}', space=vmem, size = 0x12000, scoped, tag = 'internal scratch']
  %s0 = inlined_call_operand.hbm [shape: f32[4096,32], index: 0, kind: input, shape index: {}]
  %s1 = inlined_call_operand.vmem [shape: f32[1,32], index: 1, kind: output, shape index: {0}]
  %s2 = inlined_call_operand.vmem [shape: f32[1,32], index: 2, kind: output, shape index: {1}]
  %3 = xla_tuple %s1, %s2
  %s4 = sld [smem:[#allocation0]]
  $region53: #{bn_ac_conv3d.2} parent=0
    _
  %s6 = ssub.s32 1, %s4
  %s7 = scalar_select 0, %s6, %s4
  $region1: #{bn_ac_conv3d.2} parent=0
    #allocation2 [shape = 'u8[1048576]{0}', space=vmem, size = 0x100000, scoped, tag = 'input window, operand 0']
    #allocation3 [shape = 's32[2]{0}', space=sflag, size = 0x8, scoped, tag = 'scoped memory for bn_ac_conv3d.2']
    %8 = vsyncpa [#allocation3], 0
    %s9 = scalar_lea.sflag [#allocation3], 1
    %10 = vsyncpa %s9, 0
    loop: start=0, step=1, limit=6
    $region2: #{bn_ac_conv3d.2} parent=1 // loop_pre_header
      _
    $region3: #{bn_ac_conv3d.2} parent=1 // loop_header
      %s12 = sphi 0, %s16
      %p13 = scmp.ge.s32.totalorder %s12, 6
      %s22 = sphi 0, %s24
      %s25 = sphi 0, %s22
      %s26 = sphi 0, %s25
      %s42 = sphi 0, %s26
      %s46 = sphi 0, %s46
      %s48 = sphi 0, %s46
      %s49 = sphi 0, %s48
      %s63 = sphi 0, %s49
      %s67 = sphi 0, %s67
      %s69 = sphi 0, %s67
      %s70 = sphi 0, %s69
      %s84 = sphi 0, %s70
    $region4: #{bn_ac_conv3d.2} parent=1 // loop_header_branch
      %15 = sbr.rel (%p13) target = $region8
    $region5: #{bn_ac_conv3d.2} parent=1 // loop_body
      %s17 = ssub.s32 %s12, 1
      %s18 = ssub.s32 %s12, 2
      %s19 = sadd.s32 %s12, 1
      %s20 = ssub.s32 %s12, %s19
      %p21 = scmp.eq.s32.totalorder %s20, 0
      %s23 = sadd.s32 %s22, 1
      %s24 = scalar_select %p21, %s22, %s23
      %p27 = pneg %p21
      %p28 = scmp.eq.s32.totalorder %s12, 3
      %p29 = por %p27, %p28
      %p30 = scmp.ne.s32.totalorder %s22, %s25
      %p31 = scmp.eq.s32.totalorder %s12, 0
      %p32 = por %p30, %p31
      %p33 = scmp.ne.s32.totalorder %s22, %s25
      %p34 = scmp.eq.s32.totalorder %s17, 3
      %p35 = por %p33, %p34
      %p36 = scmp.ne.s32.totalorder %s25, %s26
      %p37 = scmp.eq.s32.totalorder %s17, 0
      %p38 = por %p36, %p37
      %p39 = scmp.ne.s32.totalorder %s25, %s26
      %p40 = scmp.eq.s32.totalorder %s18, 3
      %p41 = por %p39, %p40
      %p43 = scmp.ne.s32.totalorder %s26, %s42
      %p44 = scmp.eq.s32.totalorder %s18, 0
      %p45 = por %p43, %p44
      %s47 = sadd.s32 %s46, 1
      %p50 = scmp.eq.s32.totalorder %s12, 3
      %p51 = scmp.ne.s32.totalorder %s46, %s48
      %p52 = scmp.eq.s32.totalorder %s12, 0
      %p53 = por %p51, %p52
      %p54 = scmp.ne.s32.totalorder %s46, %s48
      %p55 = scmp.eq.s32.totalorder %s17, 3
      %p56 = por %p54, %p55
      %p57 = scmp.ne.s32.totalorder %s48, %s49
      %p58 = scmp.eq.s32.totalorder %s17, 0
      %p59 = por %p57, %p58
      %p60 = scmp.ne.s32.totalorder %s48, %s49
      %p61 = scmp.eq.s32.totalorder %s18, 3
      %p62 = por %p60, %p61
      %p64 = scmp.ne.s32.totalorder %s49, %s63
      %p65 = scmp.eq.s32.totalorder %s18, 0
      %p66 = por %p64, %p65
      %s68 = sadd.s32 %s67, 1
      %p71 = scmp.eq.s32.totalorder %s12, 3
      %p72 = scmp.ne.s32.totalorder %s67, %s69
      %p73 = scmp.eq.s32.totalorder %s12, 0
      %p74 = por %p72, %p73
      %p75 = scmp.ne.s32.totalorder %s67, %s69
      %p76 = scmp.eq.s32.totalorder %s17, 3
      %p77 = por %p75, %p76
      %p78 = scmp.ne.s32.totalorder %s69, %s70
      %p79 = scmp.eq.s32.totalorder %s17, 0
      %p80 = por %p78, %p79
      %p81 = scmp.ne.s32.totalorder %s69, %s70
      %p82 = scmp.eq.s32.totalorder %s18, 3
      %p83 = por %p81, %p82
      %p85 = scmp.ne.s32.totalorder %s70, %s84
      %p86 = scmp.eq.s32.totalorder %s18, 0
      %p87 = por %p85, %p86
      %p88 = scmp.le.s32.totalorder 1, %s12
      %p89 = scmp.lt.s32.totalorder %s12, 5
      %p90 = pnand %p88, %p89
      %p91 = pneg %p90
      // Predicated region
      $region9: #{bn_ac_conv3d.2} parent=5 // pred_check
        _
      $region10: #{bn_ac_conv3d.2} parent=5 // pred_check_branch
        %93 = sbr.rel (%p90) target = $region12
      $region11: #{bn_ac_conv3d.2} parent=5 // pred_region
        %s94 = ssub.s32 %s12, 1
      $region12: #{bn_ac_conv3d.2} parent=5 // pred_fallthru
        _
      %p95 = scmp.lt.s32.totalorder %s12, 4
      // Predicated region
      $region13: #{bn_ac_conv3d.2} parent=5 // pred_check
        %p96 = pneg %p95
      $region14: #{bn_ac_conv3d.2} parent=5 // pred_check_branch
        %98 = sbr.rel (%p96) target = $region16
      $region15: #{bn_ac_conv3d.2} parent=5 // pred_region
        // Predicated region
        $region17: #{bn_ac_conv3d.2} parent=15 // pred_check
          %p99 = pneg %p32
        $region18: #{bn_ac_conv3d.2} parent=15 // pred_check_branch
          %101 = sbr.rel (%p99) target = $region20
        $region19: #{bn_ac_conv3d.2} parent=15 // pred_region
          %s102 = sand.u32 %s22, 1
          %s103 = scalar_lea.sflag [#allocation3], %s102
          %s104 = sand.u32 %s22, 1
          %s105 = smul.addr %s104, 1024
          %s106 = scalar_lea.vmem [#allocation2], %s105
          %s107 = smul.u32 128, %s12
          %s109 = ssub.s32 16384, 16384
          %110 = vsyncadd %s103, %s109
          %s111 = smul.addr %s107, 128
          %s112 = scalar_lea.hbm %s0, %s111
          %s113 = sshll.u32 %s106, 4
          %s114 = int_to_ptr.vmem [resolvable:$true] %s113
          %119 = dma.hbm_to_vmem [thread:$0]  %s112, 16384, %s114, %s103, 128, 128, 8
        $region20: #{bn_ac_conv3d.2} parent=15 // pred_fallthru
          _
      $region16: #{bn_ac_conv3d.2} parent=5 // pred_fallthru
        _
      %p120 = scmp.le.s32.totalorder 1, %s12
      %p121 = scmp.lt.s32.totalorder %s12, 5
      %p122 = pnand %p120, %p121
      %p123 = pneg %p122
      // Predicated region
      $region21: #{bn_ac_conv3d.2} parent=5 // pred_check
        _
      $region22: #{bn_ac_conv3d.2} parent=5 // pred_check_branch
        %125 = sbr.rel (%p122) target = $region24
      $region23: #{bn_ac_conv3d.2} parent=5 // pred_region
        %s126 = ssub.s32 %s12, 1
        %s127 = sand.u32 %s25, 1
        %s128 = scalar_lea.sflag [#allocation3], %s127
        %s129 = sand.u32 %s25, 1
        %s130 = smul.addr %s129, 1024
        %s131 = scalar_lea.vmem [#allocation2], %s130
        // Predicated region
        $region25: #{bn_ac_conv3d.2} parent=23 // pred_check
          %p132 = pneg %p38
        $region26: #{bn_ac_conv3d.2} parent=23 // pred_check_branch
          %134 = sbr.rel (%p132) target = $region28
        $region27: #{bn_ac_conv3d.2} parent=23 // pred_region
          %135 = dma.done %s128, 16384
        $region28: #{bn_ac_conv3d.2} parent=23 // pred_fallthru
          _
        %s136 = sand.u32 %s25, 1
        %s137 = scalar_lea.sflag [#allocation3], %s136
        %s138 = sand.u32 %s25, 1
        %s139 = smul.addr %s138, 1024
        %s140 = scalar_lea.vmem [#allocation2], %s139
        %p141 = pneg %p38
        %p142 = pneg %p35
        %p143 = pneg %p59
        %p144 = pneg %p56
        %p145 = pneg %p80
        %p146 = pneg %p77
        %s147 = smul.u32 128, %s17
        %p148 = scmp.eq.s32.totalorder %s17, 0
        // Predicated region
        $region29: #{bn_ac_conv3d.2} parent=23 // pred_check
          %p149 = pneg %p148
        $region30: #{bn_ac_conv3d.2} parent=23 // pred_check_branch
          %151 = sbr.rel (%p149) target = $region32
        $region31: #{bn_ac_conv3d.2} parent=23 // pred_region
          %vm152 = vcmask 253952
          %153 = vst.msk [vmem:[%s1] sm:$0x1] %vm152, 0.0
          %154 = vst.msk [vmem:[%s2] sm:$0x1] %vm152, 0.0
        $region32: #{bn_ac_conv3d.2} parent=23 // pred_fallthru
          _
        %v155 = vld [vmem:[%s131] sm:$0xff]
        %v156 = vld [vmem:[%s131 + $0x8] sm:$0xff]
        %v157 = vld [vmem:[%s131 + $0x10] sm:$0xff]
        %v158 = vld [vmem:[%s131 + $0x18] sm:$0xff]
        %v159 = vld [vmem:[%s131 + $0x20] sm:$0xff]
        %v160 = vld [vmem:[%s131 + $0x28] sm:$0xff]
        %v161 = vld [vmem:[%s131 + $0x30] sm:$0xff]
        %v162 = vld [vmem:[%s131 + $0x38] sm:$0xff]
        %v163 = vld [vmem:[%s131 + $0x40] sm:$0xff]
        %v164 = vld [vmem:[%s131 + $0x48] sm:$0xff]
        %v165 = vld [vmem:[%s131 + $0x50] sm:$0xff]
        %v166 = vld [vmem:[%s131 + $0x58] sm:$0xff]
        %v167 = vld [vmem:[%s131 + $0x60] sm:$0xff]
        %v168 = vld [vmem:[%s131 + $0x68] sm:$0xff]
        %v169 = vld [vmem:[%s131 + $0x70] sm:$0xff]
        %v170 = vld [vmem:[%s131 + $0x78] sm:$0xff]
        %v171 = vld [vmem:[%s131 + $0x80] sm:$0xff]
        %v172 = vld [vmem:[%s131 + $0x88] sm:$0xff]
        %v173 = vld [vmem:[%s131 + $0x90] sm:$0xff]
        %v174 = vld [vmem:[%s131 + $0x98] sm:$0xff]
        %v175 = vld [vmem:[%s131 + $0xa0] sm:$0xff]
        %v176 = vld [vmem:[%s131 + $0xa8] sm:$0xff]
        %v177 = vld [vmem:[%s131 + $0xb0] sm:$0xff]
        %v178 = vld [vmem:[%s131 + $0xb8] sm:$0xff]
        %v179 = vld [vmem:[%s131 + $0xc0] sm:$0xff]
        %v180 = vld [vmem:[%s131 + $0xc8] sm:$0xff]
        %v181 = vld [vmem:[%s131 + $0xd0] sm:$0xff]
        %v182 = vld [vmem:[%s131 + $0xd8] sm:$0xff]
        %v183 = vld [vmem:[%s131 + $0xe0] sm:$0xff]
        %v184 = vld [vmem:[%s131 + $0xe8] sm:$0xff]
        %v185 = vld [vmem:[%s131 + $0xf0] sm:$0xff]
        %v186 = vld [vmem:[%s131 + $0xf8] sm:$0xff]
        %v187 = vld [vmem:[%s131 + $0x100] sm:$0xff]
        %v188 = vld [vmem:[%s131 + $0x108] sm:$0xff]
        %v189 = vld [vmem:[%s131 + $0x110] sm:$0xff]
        %v190 = vld [vmem:[%s131 + $0x118] sm:$0xff]
        %v191 = vld [vmem:[%s131 + $0x120] sm:$0xff]
        %v192 = vld [vmem:[%s131 + $0x128] sm:$0xff]
        %v193 = vld [vmem:[%s131 + $0x130] sm:$0xff]
        %v194 = vld [vmem:[%s131 + $0x138] sm:$0xff]
        %v195 = vld [vmem:[%s131 + $0x140] sm:$0xff]
        %v196 = vld [vmem:[%s131 + $0x148] sm:$0xff]
        %v197 = vld [vmem:[%s131 + $0x150] sm:$0xff]
        %v198 = vld [vmem:[%s131 + $0x158] sm:$0xff]
        %v199 = vld [vmem:[%s131 + $0x160] sm:$0xff]
        %v200 = vld [vmem:[%s131 + $0x168] sm:$0xff]
        %v201 = vld [vmem:[%s131 + $0x170] sm:$0xff]
        %v202 = vld [vmem:[%s131 + $0x178] sm:$0xff]
        %v203 = vld [vmem:[%s131 + $0x180] sm:$0xff]
        %v204 = vld [vmem:[%s131 + $0x188] sm:$0xff]
        %v205 = vld [vmem:[%s131 + $0x190] sm:$0xff]
        %v206 = vld [vmem:[%s131 + $0x198] sm:$0xff]
        %v207 = vld [vmem:[%s131 + $0x1a0] sm:$0xff]
        %v208 = vld [vmem:[%s131 + $0x1a8] sm:$0xff]
        %v209 = vld [vmem:[%s131 + $0x1b0] sm:$0xff]
        %v210 = vld [vmem:[%s131 + $0x1b8] sm:$0xff]
        %v211 = vld [vmem:[%s131 + $0x1c0] sm:$0xff]
        %v212 = vld [vmem:[%s131 + $0x1c8] sm:$0xff]
        %v213 = vld [vmem:[%s131 + $0x1d0] sm:$0xff]
        %v214 = vld [vmem:[%s131 + $0x1d8] sm:$0xff]
        %v215 = vld [vmem:[%s131 + $0x1e0] sm:$0xff]
        %v216 = vld [vmem:[%s131 + $0x1e8] sm:$0xff]
        %v217 = vld [vmem:[%s131 + $0x1f0] sm:$0xff]
        %v218 = vld [vmem:[%s131 + $0x1f8] sm:$0xff]
        %v219 = vld [vmem:[%s131 + $0x200] sm:$0xff]
        %v220 = vld [vmem:[%s131 + $0x208] sm:$0xff]
        %v221 = vld [vmem:[%s131 + $0x210] sm:$0xff]
        %v222 = vld [vmem:[%s131 + $0x218] sm:$0xff]
        %v223 = vld [vmem:[%s131 + $0x220] sm:$0xff]
        %v224 = vld [vmem:[%s131 + $0x228] sm:$0xff]
        %v225 = vld [vmem:[%s131 + $0x230] sm:$0xff]
        %v226 = vld [vmem:[%s131 + $0x238] sm:$0xff]
        %v227 = vld [vmem:[%s131 + $0x240] sm:$0xff]
        %v228 = vld [vmem:[%s131 + $0x248] sm:$0xff]
        %v229 = vld [vmem:[%s131 + $0x250] sm:$0xff]
        %v230 = vld [vmem:[%s131 + $0x258] sm:$0xff]
        %v231 = vld [vmem:[%s131 + $0x260] sm:$0xff]
        %v232 = vld [vmem:[%s131 + $0x268] sm:$0xff]
        %v233 = vld [vmem:[%s131 + $0x270] sm:$0xff]
        %v234 = vld [vmem:[%s131 + $0x278] sm:$0xff]
        %v235 = vld [vmem:[%s131 + $0x280] sm:$0xff]
        %v236 = vld [vmem:[%s131 + $0x288] sm:$0xff]
        %v237 = vld [vmem:[%s131 + $0x290] sm:$0xff]
        %v238 = vld [vmem:[%s131 + $0x298] sm:$0xff]
        %v239 = vld [vmem:[%s131 + $0x2a0] sm:$0xff]
        %v240 = vld [vmem:[%s131 + $0x2a8] sm:$0xff]
        %v241 = vld [vmem:[%s131 + $0x2b0] sm:$0xff]
        %v242 = vld [vmem:[%s131 + $0x2b8] sm:$0xff]
        %v243 = vld [vmem:[%s131 + $0x2c0] sm:$0xff]
        %v244 = vld [vmem:[%s131 + $0x2c8] sm:$0xff]
        %v245 = vld [vmem:[%s131 + $0x2d0] sm:$0xff]
        %v246 = vld [vmem:[%s131 + $0x2d8] sm:$0xff]
        %v247 = vld [vmem:[%s131 + $0x2e0] sm:$0xff]
        %v248 = vld [vmem:[%s131 + $0x2e8] sm:$0xff]
        %v249 = vld [vmem:[%s131 + $0x2f0] sm:$0xff]
        %v250 = vld [vmem:[%s131 + $0x2f8] sm:$0xff]
        %v251 = vld [vmem:[%s131 + $0x300] sm:$0xff]
        %v252 = vld [vmem:[%s131 + $0x308] sm:$0xff]
        %v253 = vld [vmem:[%s131 + $0x310] sm:$0xff]
        %v254 = vld [vmem:[%s131 + $0x318] sm:$0xff]
        %v255 = vld [vmem:[%s131 + $0x320] sm:$0xff]
        %v256 = vld [vmem:[%s131 + $0x328] sm:$0xff]
        %v257 = vld [vmem:[%s131 + $0x330] sm:$0xff]
        %v258 = vld [vmem:[%s131 + $0x338] sm:$0xff]
        %v259 = vld [vmem:[%s131 + $0x340] sm:$0xff]
        %v260 = vld [vmem:[%s131 + $0x348] sm:$0xff]
        %v261 = vld [vmem:[%s131 + $0x350] sm:$0xff]
        %v262 = vld [vmem:[%s131 + $0x358] sm:$0xff]
        %v263 = vld [vmem:[%s131 + $0x360] sm:$0xff]
        %v264 = vld [vmem:[%s131 + $0x368] sm:$0xff]
        %v265 = vld [vmem:[%s131 + $0x370] sm:$0xff]
        %v266 = vld [vmem:[%s131 + $0x378] sm:$0xff]
        %v267 = vld [vmem:[%s131 + $0x380] sm:$0xff]
        %v268 = vld [vmem:[%s131 + $0x388] sm:$0xff]
        %v269 = vld [vmem:[%s131 + $0x390] sm:$0xff]
        %v270 = vld [vmem:[%s131 + $0x398] sm:$0xff]
        %v271 = vld [vmem:[%s131 + $0x3a0] sm:$0xff]
        %v272 = vld [vmem:[%s131 + $0x3a8] sm:$0xff]
        %v273 = vld [vmem:[%s131 + $0x3b0] sm:$0xff]
        %v274 = vld [vmem:[%s131 + $0x3b8] sm:$0xff]
        %v275 = vld [vmem:[%s131 + $0x3c0] sm:$0xff]
        %v276 = vld [vmem:[%s131 + $0x3c8] sm:$0xff]
        %v277 = vld [vmem:[%s131 + $0x3d0] sm:$0xff]
        %v278 = vld [vmem:[%s131 + $0x3d8] sm:$0xff]
        %v279 = vld [vmem:[%s131 + $0x3e0] sm:$0xff]
        %v280 = vld [vmem:[%s131 + $0x3e8] sm:$0xff]
        %v281 = vld [vmem:[%s131 + $0x3f0] sm:$0xff]
        %v282 = vld [vmem:[%s131 + $0x3f8] sm:$0xff]
        %v283 = vld [vmem:[%s1] sm:$0x1]
        %vm284 = vcmask 261120
        %v285 = vsel %vm284, %v155, 0.0
        %v286 = vsel %vm284, %v156, 0.0
        %v287 = vadd.f32 %v285, %v286
        %v288 = vsel %vm284, %v157, 0.0
        %v289 = vadd.f32 %v287, %v288
        %v290 = vsel %vm284, %v158, 0.0
        %v291 = vadd.f32 %v289, %v290
        %v292 = vsel %vm284, %v159, 0.0
        %v293 = vadd.f32 %v291, %v292
        %v294 = vsel %vm284, %v160, 0.0
        %v295 = vadd.f32 %v293, %v294
        %v296 = vsel %vm284, %v161, 0.0
        %v297 = vadd.f32 %v295, %v296
        %v298 = vsel %vm284, %v162, 0.0
        %v299 = vadd.f32 %v297, %v298
        %v300 = vsel %vm284, %v163, 0.0
        %v301 = vadd.f32 %v299, %v300
        %v302 = vsel %vm284, %v164, 0.0
        %v303 = vadd.f32 %v301, %v302
        %v304 = vsel %vm284, %v165, 0.0
        %v305 = vadd.f32 %v303, %v304
        %v306 = vsel %vm284, %v166, 0.0
        %v307 = vadd.f32 %v305, %v306
        %v308 = vsel %vm284, %v167, 0.0
        %v309 = vadd.f32 %v307, %v308
        %v310 = vsel %vm284, %v168, 0.0
        %v311 = vadd.f32 %v309, %v310
        %v312 = vsel %vm284, %v169, 0.0
        %v313 = vadd.f32 %v311, %v312
        %v314 = vsel %vm284, %v170, 0.0
        %v315 = vadd.f32 %v313, %v314
        %v316 = vsel %vm284, %v171, 0.0
        %v317 = vadd.f32 %v315, %v316
        %v318 = vsel %vm284, %v172, 0.0
        %v319 = vadd.f32 %v317, %v318
        %v320 = vsel %vm284, %v173, 0.0
        %v321 = vadd.f32 %v319, %v320
        %v322 = vsel %vm284, %v174, 0.0
        %v323 = vadd.f32 %v321, %v322
        %v324 = vsel %vm284, %v175, 0.0
        %v325 = vadd.f32 %v323, %v324
        %v326 = vsel %vm284, %v176, 0.0
        %v327 = vadd.f32 %v325, %v326
        %v328 = vsel %vm284, %v177, 0.0
        %v329 = vadd.f32 %v327, %v328
        %v330 = vsel %vm284, %v178, 0.0
        %v331 = vadd.f32 %v329, %v330
        %v332 = vsel %vm284, %v179, 0.0
        %v333 = vadd.f32 %v331, %v332
        %v334 = vsel %vm284, %v180, 0.0
        %v335 = vadd.f32 %v333, %v334
        %v336 = vsel %vm284, %v181, 0.0
        %v337 = vadd.f32 %v335, %v336
        %v338 = vsel %vm284, %v182, 0.0
        %v339 = vadd.f32 %v337, %v338
        %v340 = vsel %vm284, %v183, 0.0
        %v341 = vadd.f32 %v339, %v340
        %v342 = vsel %vm284, %v184, 0.0
        %v343 = vadd.f32 %v341, %v342
        %v344 = vsel %vm284, %v185, 0.0
        %v345 = vadd.f32 %v343, %v344
        %v346 = vsel %vm284, %v186, 0.0
        %v347 = vadd.f32 %v345, %v346
        %v348 = vsel %vm284, %v187, 0.0
        %v349 = vadd.f32 %v347, %v348
        %v350 = vsel %vm284, %v188, 0.0
        %v351 = vadd.f32 %v349, %v350
        %v352 = vsel %vm284, %v189, 0.0
        %v353 = vadd.f32 %v351, %v352
        %v354 = vsel %vm284, %v190, 0.0
        %v355 = vadd.f32 %v353, %v354
        %v356 = vsel %vm284, %v191, 0.0
        %v357 = vadd.f32 %v355, %v356
        %v358 = vsel %vm284, %v192, 0.0
        %v359 = vadd.f32 %v357, %v358
        %v360 = vsel %vm284, %v193, 0.0
        %v361 = vadd.f32 %v359, %v360
        %v362 = vsel %vm284, %v194, 0.0
        %v363 = vadd.f32 %v361, %v362
        %v364 = vsel %vm284, %v195, 0.0
        %v365 = vadd.f32 %v363, %v364
        %v366 = vsel %vm284, %v196, 0.0
        %v367 = vadd.f32 %v365, %v366
        %v368 = vsel %vm284, %v197, 0.0
        %v369 = vadd.f32 %v367, %v368
        %v370 = vsel %vm284, %v198, 0.0
        %v371 = vadd.f32 %v369, %v370
        %v372 = vsel %vm284, %v199, 0.0
        %v373 = vadd.f32 %v371, %v372
        %v374 = vsel %vm284, %v200, 0.0
        %v375 = vadd.f32 %v373, %v374
        %v376 = vsel %vm284, %v201, 0.0
        %v377 = vadd.f32 %v375, %v376
        %v378 = vsel %vm284, %v202, 0.0
        %v379 = vadd.f32 %v377, %v378
        %v380 = vsel %vm284, %v203, 0.0
        %v381 = vadd.f32 %v379, %v380
        %v382 = vsel %vm284, %v204, 0.0
        %v383 = vadd.f32 %v381, %v382
        %v384 = vsel %vm284, %v205, 0.0
        %v385 = vadd.f32 %v383, %v384
        %v386 = vsel %vm284, %v206, 0.0
        %v387 = vadd.f32 %v385, %v386
        %v388 = vsel %vm284, %v207, 0.0
        %v389 = vadd.f32 %v387, %v388
        %v390 = vsel %vm284, %v208, 0.0
        %v391 = vadd.f32 %v389, %v390
        %v392 = vsel %vm284, %v209, 0.0
        %v393 = vadd.f32 %v391, %v392
        %v394 = vsel %vm284, %v210, 0.0
        %v395 = vadd.f32 %v393, %v394
        %v396 = vsel %vm284, %v211, 0.0
        %v397 = vadd.f32 %v395, %v396
        %v398 = vsel %vm284, %v212, 0.0
        %v399 = vadd.f32 %v397, %v398
        %v400 = vsel %vm284, %v213, 0.0
        %v401 = vadd.f32 %v399, %v400
        %v402 = vsel %vm284, %v214, 0.0
        %v403 = vadd.f32 %v401, %v402
        %v404 = vsel %vm284, %v215, 0.0
        %v405 = vadd.f32 %v403, %v404
        %v406 = vsel %vm284, %v216, 0.0
        %v407 = vadd.f32 %v405, %v406
        %v408 = vsel %vm284, %v217, 0.0
        %v409 = vadd.f32 %v407, %v408
        %v410 = vsel %vm284, %v218, 0.0
        %v411 = vadd.f32 %v409, %v410
        %v412 = vsel %vm284, %v219, 0.0
        %v413 = vadd.f32 %v411, %v412
        %v414 = vsel %vm284, %v220, 0.0
        %v415 = vadd.f32 %v413, %v414
        %v416 = vsel %vm284, %v221, 0.0
        %v417 = vadd.f32 %v415, %v416
        %v418 = vsel %vm284, %v222, 0.0
        %v419 = vadd.f32 %v417, %v418
        %v420 = vsel %vm284, %v223, 0.0
        %v421 = vadd.f32 %v419, %v420
        %v422 = vsel %vm284, %v224, 0.0
        %v423 = vadd.f32 %v421, %v422
        %v424 = vsel %vm284, %v225, 0.0
        %v425 = vadd.f32 %v423, %v424
        %v426 = vsel %vm284, %v226, 0.0
        %v427 = vadd.f32 %v425, %v426
        %v428 = vsel %vm284, %v227, 0.0
        %v429 = vadd.f32 %v427, %v428
        %v430 = vsel %vm284, %v228, 0.0
        %v431 = vadd.f32 %v429, %v430
        %v432 = vsel %vm284, %v229, 0.0
        %v433 = vadd.f32 %v431, %v432
        %v434 = vsel %vm284, %v230, 0.0
        %v435 = vadd.f32 %v433, %v434
        %v436 = vsel %vm284, %v231, 0.0
        %v437 = vadd.f32 %v435, %v436
        %v438 = vsel %vm284, %v232, 0.0
        %v439 = vadd.f32 %v437, %v438
        %v440 = vsel %vm284, %v233, 0.0
        %v441 = vadd.f32 %v439, %v440
        %v442 = vsel %vm284, %v234, 0.0
        %v443 = vadd.f32 %v441, %v442
        %v444 = vsel %vm284, %v235, 0.0
        %v445 = vadd.f32 %v443, %v444
        %v446 = vsel %vm284, %v236, 0.0
        %v447 = vadd.f32 %v445, %v446
        %v448 = vsel %vm284, %v237, 0.0
        %v449 = vadd.f32 %v447, %v448
        %v450 = vsel %vm284, %v238, 0.0
        %v451 = vadd.f32 %v449, %v450
        %v452 = vsel %vm284, %v239, 0.0
        %v453 = vadd.f32 %v451, %v452
        %v454 = vsel %vm284, %v240, 0.0
        %v455 = vadd.f32 %v453, %v454
        %v456 = vsel %vm284, %v241, 0.0
        %v457 = vadd.f32 %v455, %v456
        %v458 = vsel %vm284, %v242, 0.0
        %v459 = vadd.f32 %v457, %v458
        %v460 = vsel %vm284, %v243, 0.0
        %v461 = vadd.f32 %v459, %v460
        %v462 = vsel %vm284, %v244, 0.0
        %v463 = vadd.f32 %v461, %v462
        %v464 = vsel %vm284, %v245, 0.0
        %v465 = vadd.f32 %v463, %v464
        %v466 = vsel %vm284, %v246, 0.0
        %v467 = vadd.f32 %v465, %v466
        %v468 = vsel %vm284, %v247, 0.0
        %v469 = vadd.f32 %v467, %v468
        %v470 = vsel %vm284, %v248, 0.0
        %v471 = vadd.f32 %v469, %v470
        %v472 = vsel %vm284, %v249, 0.0
        %v473 = vadd.f32 %v471, %v472
        %v474 = vsel %vm284, %v250, 0.0
        %v475 = vadd.f32 %v473, %v474
        %v476 = vsel %vm284, %v251, 0.0
        %v477 = vadd.f32 %v475, %v476
        %v478 = vsel %vm284, %v252, 0.0
        %v479 = vadd.f32 %v477, %v478
        %v480 = vsel %vm284, %v253, 0.0
        %v481 = vadd.f32 %v479, %v480
        %v482 = vsel %vm284, %v254, 0.0
        %v483 = vadd.f32 %v481, %v482
        %v484 = vsel %vm284, %v255, 0.0
        %v485 = vadd.f32 %v483, %v484
        %v486 = vsel %vm284, %v256, 0.0
        %v487 = vadd.f32 %v485, %v486
        %v488 = vsel %vm284, %v257, 0.0
        %v489 = vadd.f32 %v487, %v488
        %v490 = vsel %vm284, %v258, 0.0
        %v491 = vadd.f32 %v489, %v490
        %v492 = vsel %vm284, %v259, 0.0
        %v493 = vadd.f32 %v491, %v492
        %v494 = vsel %vm284, %v260, 0.0
        %v495 = vadd.f32 %v493, %v494
        %v496 = vsel %vm284, %v261, 0.0
        %v497 = vadd.f32 %v495, %v496
        %v498 = vsel %vm284, %v262, 0.0
        %v499 = vadd.f32 %v497, %v498
        %v500 = vsel %vm284, %v263, 0.0
        %v501 = vadd.f32 %v499, %v500
        %v502 = vsel %vm284, %v264, 0.0
        %v503 = vadd.f32 %v501, %v502
        %v504 = vsel %vm284, %v265, 0.0
        %v505 = vadd.f32 %v503, %v504
        %v506 = vsel %vm284, %v266, 0.0
        %v507 = vadd.f32 %v505, %v506
        %v508 = vsel %vm284, %v267, 0.0
        %v509 = vadd.f32 %v507, %v508
        %v510 = vsel %vm284, %v268, 0.0
        %v511 = vadd.f32 %v509, %v510
        %v512 = vsel %vm284, %v269, 0.0
        %v513 = vadd.f32 %v511, %v512
        %v514 = vsel %vm284, %v270, 0.0
        %v515 = vadd.f32 %v513, %v514
        %v516 = vsel %vm284, %v271, 0.0
        %v517 = vadd.f32 %v515, %v516
        %v518 = vsel %vm284, %v272, 0.0
        %v519 = vadd.f32 %v517, %v518
        %v520 = vsel %vm284, %v273, 0.0
        %v521 = vadd.f32 %v519, %v520
        %v522 = vsel %vm284, %v274, 0.0
        %v523 = vadd.f32 %v521, %v522
        %v524 = vsel %vm284, %v275, 0.0
        %v525 = vadd.f32 %v523, %v524
        %v526 = vsel %vm284, %v276, 0.0
        %v527 = vadd.f32 %v525, %v526
        %v528 = vsel %vm284, %v277, 0.0
        %v529 = vadd.f32 %v527, %v528
        %v530 = vsel %vm284, %v278, 0.0
        %v531 = vadd.f32 %v529, %v530
        %v532 = vsel %vm284, %v279, 0.0
        %v533 = vadd.f32 %v531, %v532
        %v534 = vsel %vm284, %v280, 0.0
        %v535 = vadd.f32 %v533, %v534
        %v536 = vsel %vm284, %v281, 0.0
        %v537 = vadd.f32 %v535, %v536
        %v538 = vsel %vm284, %v282, 0.0
        %v539 = vadd.f32 %v537, %v538
        %v540 = vrot.slane %v539, 4
        %v541 = vadd.f32 %v539, %v540
        %v542 = vrot.slane %v541, 2
        %v543 = vadd.f32 %v541, %v542
        %v544 = vrot.slane %v543, 1
        %v545 = vadd.f32 %v543, %v544
        %v546 = vadd.f32 %v283, %v545
        %vm547 = vcmask 253952
        %548 = vst.msk [vmem:[%s1] sm:$0x1] %vm547, %v546
        %v549 = vld [vmem:[%s2] sm:$0x1]
        %v550 = vmul.f32 %v155, %v155
        %v551 = vmul.f32 %v156, %v156
        %v552 = vmul.f32 %v157, %v157
        %v553 = vmul.f32 %v158, %v158
        %v554 = vmul.f32 %v159, %v159
        %v555 = vmul.f32 %v160, %v160
        %v556 = vmul.f32 %v161, %v161
        %v557 = vmul.f32 %v162, %v162
        %v558 = vmul.f32 %v163, %v163
        %v559 = vmul.f32 %v164, %v164
        %v560 = vmul.f32 %v165, %v165
        %v561 = vmul.f32 %v166, %v166
        %v562 = vmul.f32 %v167, %v167
        %v563 = vmul.f32 %v168, %v168
        %v564 = vmul.f32 %v169, %v169
        %v565 = vmul.f32 %v170, %v170
        %v566 = vmul.f32 %v171, %v171
        %v567 = vmul.f32 %v172, %v172
        %v568 = vmul.f32 %v173, %v173
        %v569 = vmul.f32 %v174, %v174
        %v570 = vmul.f32 %v175, %v175
        %v571 = vmul.f32 %v176, %v176
        %v572 = vmul.f32 %v177, %v177
        %v573 = vmul.f32 %v178, %v178
        %v574 = vmul.f32 %v179, %v179
        %v575 = vmul.f32 %v180, %v180
        %v576 = vmul.f32 %v181, %v181
        %v577 = vmul.f32 %v182, %v182
        %v578 = vmul.f32 %v183, %v183
        %v579 = vmul.f32 %v184, %v184
        %v580 = vmul.f32 %v185, %v185
        %v581 = vmul.f32 %v186, %v186
        %v582 = vmul.f32 %v187, %v187
        %v583 = vmul.f32 %v188, %v188
        %v584 = vmul.f32 %v189, %v189
        %v585 = vmul.f32 %v190, %v190
        %v586 = vmul.f32 %v191, %v191
        %v587 = vmul.f32 %v192, %v192
        %v588 = vmul.f32 %v193, %v193
        %v589 = vmul.f32 %v194, %v194
        %v590 = vmul.f32 %v195, %v195
        %v591 = vmul.f32 %v196, %v196
        %v592 = vmul.f32 %v197, %v197
        %v593 = vmul.f32 %v198, %v198
        %v594 = vmul.f32 %v199, %v199
        %v595 = vmul.f32 %v200, %v200
        %v596 = vmul.f32 %v201, %v201
        %v597 = vmul.f32 %v202, %v202
        %v598 = vmul.f32 %v203, %v203
        %v599 = vmul.f32 %v204, %v204
        %v600 = vmul.f32 %v205, %v205
        %v601 = vmul.f32 %v206, %v206
        %v602 = vmul.f32 %v207, %v207
        %v603 = vmul.f32 %v208, %v208
        %v604 = vmul.f32 %v209, %v209
        %v605 = vmul.f32 %v210, %v210
        %v606 = vmul.f32 %v211, %v211
        %v607 = vmul.f32 %v212, %v212
        %v608 = vmul.f32 %v213, %v213
        %v609 = vmul.f32 %v214, %v214
        %v610 = vmul.f32 %v215, %v215
        %v611 = vmul.f32 %v216, %v216
        %v612 = vmul.f32 %v217, %v217
        %v613 = vmul.f32 %v218, %v218
        %v614 = vmul.f32 %v219, %v219
        %v615 = vmul.f32 %v220, %v220
        %v616 = vmul.f32 %v221, %v221
        %v617 = vmul.f32 %v222, %v222
        %v618 = vmul.f32 %v223, %v223
        %v619 = vmul.f32 %v224, %v224
        %v620 = vmul.f32 %v225, %v225
        %v621 = vmul.f32 %v226, %v226
        %v622 = vmul.f32 %v227, %v227
        %v623 = vmul.f32 %v228, %v228
        %v624 = vmul.f32 %v229, %v229
        %v625 = vmul.f32 %v230, %v230
        %v626 = vmul.f32 %v231, %v231
        %v627 = vmul.f32 %v232, %v232
        %v628 = vmul.f32 %v233, %v233
        %v629 = vmul.f32 %v234, %v234
        %v630 = vmul.f32 %v235, %v235
        %v631 = vmul.f32 %v236, %v236
        %v632 = vmul.f32 %v237, %v237
        %v633 = vmul.f32 %v238, %v238
        %v634 = vmul.f32 %v239, %v239
        %v635 = vmul.f32 %v240, %v240
        %v636 = vmul.f32 %v241, %v241
        %v637 = vmul.f32 %v242, %v242
        %v638 = vmul.f32 %v243, %v243
        %v639 = vmul.f32 %v244, %v244
        %v640 = vmul.f32 %v245, %v245
        %v641 = vmul.f32 %v246, %v246
        %v642 = vmul.f32 %v247, %v247
        %v643 = vmul.f32 %v248, %v248
        %v644 = vmul.f32 %v249, %v249
        %v645 = vmul.f32 %v250, %v250
        %v646 = vmul.f32 %v251, %v251
        %v647 = vmul.f32 %v252, %v252
        %v648 = vmul.f32 %v253, %v253
        %v649 = vmul.f32 %v254, %v254
        %v650 = vmul.f32 %v255, %v255
        %v651 = vmul.f32 %v256, %v256
        %v652 = vmul.f32 %v257, %v257
        %v653 = vmul.f32 %v258, %v258
        %v654 = vmul.f32 %v259, %v259
        %v655 = vmul.f32 %v260, %v260
        %v656 = vmul.f32 %v261, %v261
        %v657 = vmul.f32 %v262, %v262
        %v658 = vmul.f32 %v263, %v263
        %v659 = vmul.f32 %v264, %v264
        %v660 = vmul.f32 %v265, %v265
        %v661 = vmul.f32 %v266, %v266
        %v662 = vmul.f32 %v267, %v267
        %v663 = vmul.f32 %v268, %v268
        %v664 = vmul.f32 %v269, %v269
        %v665 = vmul.f32 %v270, %v270
        %v666 = vmul.f32 %v271, %v271
        %v667 = vmul.f32 %v272, %v272
        %v668 = vmul.f32 %v273, %v273
        %v669 = vmul.f32 %v274, %v274
        %v670 = vmul.f32 %v275, %v275
        %v671 = vmul.f32 %v276, %v276
        %v672 = vmul.f32 %v277, %v277
        %v673 = vmul.f32 %v278, %v278
        %v674 = vmul.f32 %v279, %v279
        %v675 = vmul.f32 %v280, %v280
        %v676 = vmul.f32 %v281, %v281
        %v677 = vmul.f32 %v282, %v282
        %v678 = vsel %vm284, %v550, 0.0
        %v679 = vsel %vm284, %v551, 0.0
        %v680 = vadd.f32 %v678, %v679
        %v681 = vsel %vm284, %v552, 0.0
        %v682 = vadd.f32 %v680, %v681
        %v683 = vsel %vm284, %v553, 0.0
        %v684 = vadd.f32 %v682, %v683
        %v685 = vsel %vm284, %v554, 0.0
        %v686 = vadd.f32 %v684, %v685
        %v687 = vsel %vm284, %v555, 0.0
        %v688 = vadd.f32 %v686, %v687
        %v689 = vsel %vm284, %v556, 0.0
        %v690 = vadd.f32 %v688, %v689
        %v691 = vsel %vm284, %v557, 0.0
        %v692 = vadd.f32 %v690, %v691
        %v693 = vsel %vm284, %v558, 0.0
        %v694 = vadd.f32 %v692, %v693
        %v695 = vsel %vm284, %v559, 0.0
        %v696 = vadd.f32 %v694, %v695
        %v697 = vsel %vm284, %v560, 0.0
        %v698 = vadd.f32 %v696, %v697
        %v699 = vsel %vm284, %v561, 0.0
        %v700 = vadd.f32 %v698, %v699
        %v701 = vsel %vm284, %v562, 0.0
        %v702 = vadd.f32 %v700, %v701
        %v703 = vsel %vm284, %v563, 0.0
        %v704 = vadd.f32 %v702, %v703
        %v705 = vsel %vm284, %v564, 0.0
        %v706 = vadd.f32 %v704, %v705
        %v707 = vsel %vm284, %v565, 0.0
        %v708 = vadd.f32 %v706, %v707
        %v709 = vsel %vm284, %v566, 0.0
        %v710 = vadd.f32 %v708, %v709
        %v711 = vsel %vm284, %v567, 0.0
        %v712 = vadd.f32 %v710, %v711
        %v713 = vsel %vm284, %v568, 0.0
        %v714 = vadd.f32 %v712, %v713
        %v715 = vsel %vm284, %v569, 0.0
        %v716 = vadd.f32 %v714, %v715
        %v717 = vsel %vm284, %v570, 0.0
        %v718 = vadd.f32 %v716, %v717
        %v719 = vsel %vm284, %v571, 0.0
        %v720 = vadd.f32 %v718, %v719
        %v721 = vsel %vm284, %v572, 0.0
        %v722 = vadd.f32 %v720, %v721
        %v723 = vsel %vm284, %v573, 0.0
        %v724 = vadd.f32 %v722, %v723
        %v725 = vsel %vm284, %v574, 0.0
        %v726 = vadd.f32 %v724, %v725
        %v727 = vsel %vm284, %v575, 0.0
        %v728 = vadd.f32 %v726, %v727
        %v729 = vsel %vm284, %v576, 0.0
        %v730 = vadd.f32 %v728, %v729
        %v731 = vsel %vm284, %v577, 0.0
        %v732 = vadd.f32 %v730, %v731
        %v733 = vsel %vm284, %v578, 0.0
        %v734 = vadd.f32 %v732, %v733
        %v735 = vsel %vm284, %v579, 0.0
        %v736 = vadd.f32 %v734, %v735
        %v737 = vsel %vm284, %v580, 0.0
        %v738 = vadd.f32 %v736, %v737
        %v739 = vsel %vm284, %v581, 0.0
        %v740 = vadd.f32 %v738, %v739
        %v741 = vsel %vm284, %v582, 0.0
        %v742 = vadd.f32 %v740, %v741
        %v743 = vsel %vm284, %v583, 0.0
        %v744 = vadd.f32 %v742, %v743
        %v745 = vsel %vm284, %v584, 0.0
        %v746 = vadd.f32 %v744, %v745
        %v747 = vsel %vm284, %v585, 0.0
        %v748 = vadd.f32 %v746, %v747
        %v749 = vsel %vm284, %v586, 0.0
        %v750 = vadd.f32 %v748, %v749
        %v751 = vsel %vm284, %v587, 0.0
        %v752 = vadd.f32 %v750, %v751
        %v753 = vsel %vm284, %v588, 0.0
        %v754 = vadd.f32 %v752, %v753
        %v755 = vsel %vm284, %v589, 0.0
        %v756 = vadd.f32 %v754, %v755
        %v757 = vsel %vm284, %v590, 0.0
        %v758 = vadd.f32 %v756, %v757
        %v759 = vsel %vm284, %v591, 0.0
        %v760 = vadd.f32 %v758, %v759
        %v761 = vsel %vm284, %v592, 0.0
        %v762 = vadd.f32 %v760, %v761
        %v763 = vsel %vm284, %v593, 0.0
        %v764 = vadd.f32 %v762, %v763
        %v765 = vsel %vm284, %v594, 0.0
        %v766 = vadd.f32 %v764, %v765
        %v767 = vsel %vm284, %v595, 0.0
        %v768 = vadd.f32 %v766, %v767
        %v769 = vsel %vm284, %v596, 0.0
        %v770 = vadd.f32 %v768, %v769
        %v771 = vsel %vm284, %v597, 0.0
        %v772 = vadd.f32 %v770, %v771
        %v773 = vsel %vm284, %v598, 0.0
        %v774 = vadd.f32 %v772, %v773
        %v775 = vsel %vm284, %v599, 0.0
        %v776 = vadd.f32 %v774, %v775
        %v777 = vsel %vm284, %v600, 0.0
        %v778 = vadd.f32 %v776, %v777
        %v779 = vsel %vm284, %v601, 0.0
        %v780 = vadd.f32 %v778, %v779
        %v781 = vsel %vm284, %v602, 0.0
        %v782 = vadd.f32 %v780, %v781
        %v783 = vsel %vm284, %v603, 0.0
        %v784 = vadd.f32 %v782, %v783
        %v785 = vsel %vm284, %v604, 0.0
        %v786 = vadd.f32 %v784, %v785
        %v787 = vsel %vm284, %v605, 0.0
        %v788 = vadd.f32 %v786, %v787
        %v789 = vsel %vm284, %v606, 0.0
        %v790 = vadd.f32 %v788, %v789
        %v791 = vsel %vm284, %v607, 0.0
        %v792 = vadd.f32 %v790, %v791
        %v793 = vsel %vm284, %v608, 0.0
        %v794 = vadd.f32 %v792, %v793
        %v795 = vsel %vm284, %v609, 0.0
        %v796 = vadd.f32 %v794, %v795
        %v797 = vsel %vm284, %v610, 0.0
        %v798 = vadd.f32 %v796, %v797
        %v799 = vsel %vm284, %v611, 0.0
        %v800 = vadd.f32 %v798, %v799
        %v801 = vsel %vm284, %v612, 0.0
        %v802 = vadd.f32 %v800, %v801
        %v803 = vsel %vm284, %v613, 0.0
        %v804 = vadd.f32 %v802, %v803
        %v805 = vsel %vm284, %v614, 0.0
        %v806 = vadd.f32 %v804, %v805
        %v807 = vsel %vm284, %v615, 0.0
        %v808 = vadd.f32 %v806, %v807
        %v809 = vsel %vm284, %v616, 0.0
        %v810 = vadd.f32 %v808, %v809
        %v811 = vsel %vm284, %v617, 0.0
        %v812 = vadd.f32 %v810, %v811
        %v813 = vsel %vm284, %v618, 0.0
        %v814 = vadd.f32 %v812, %v813
        %v815 = vsel %vm284, %v619, 0.0
        %v816 = vadd.f32 %v814, %v815
        %v817 = vsel %vm284, %v620, 0.0
        %v818 = vadd.f32 %v816, %v817
        %v819 = vsel %vm284, %v621, 0.0
        %v820 = vadd.f32 %v818, %v819
        %v821 = vsel %vm284, %v622, 0.0
        %v822 = vadd.f32 %v820, %v821
        %v823 = vsel %vm284, %v623, 0.0
        %v824 = vadd.f32 %v822, %v823
        %v825 = vsel %vm284, %v624, 0.0
        %v826 = vadd.f32 %v824, %v825
        %v827 = vsel %vm284, %v625, 0.0
        %v828 = vadd.f32 %v826, %v827
        %v829 = vsel %vm284, %v626, 0.0
        %v830 = vadd.f32 %v828, %v829
        %v831 = vsel %vm284, %v627, 0.0
        %v832 = vadd.f32 %v830, %v831
        %v833 = vsel %vm284, %v628, 0.0
        %v834 = vadd.f32 %v832, %v833
        %v835 = vsel %vm284, %v629, 0.0
        %v836 = vadd.f32 %v834, %v835
        %v837 = vsel %vm284, %v630, 0.0
        %v838 = vadd.f32 %v836, %v837
        %v839 = vsel %vm284, %v631, 0.0
        %v840 = vadd.f32 %v838, %v839
        %v841 = vsel %vm284, %v632, 0.0
        %v842 = vadd.f32 %v840, %v841
        %v843 = vsel %vm284, %v633, 0.0
        %v844 = vadd.f32 %v842, %v843
        %v845 = vsel %vm284, %v634, 0.0
        %v846 = vadd.f32 %v844, %v845
        %v847 = vsel %vm284, %v635, 0.0
        %v848 = vadd.f32 %v846, %v847
        %v849 = vsel %vm284, %v636, 0.0
        %v850 = vadd.f32 %v848, %v849
        %v851 = vsel %vm284, %v637, 0.0
        %v852 = vadd.f32 %v850, %v851
        %v853 = vsel %vm284, %v638, 0.0
        %v854 = vadd.f32 %v852, %v853
        %v855 = vsel %vm284, %v639, 0.0
        %v856 = vadd.f32 %v854, %v855
        %v857 = vsel %vm284, %v640, 0.0
        %v858 = vadd.f32 %v856, %v857
        %v859 = vsel %vm284, %v641, 0.0
        %v860 = vadd.f32 %v858, %v859
        %v861 = vsel %vm284, %v642, 0.0
        %v862 = vadd.f32 %v860, %v861
        %v863 = vsel %vm284, %v643, 0.0
        %v864 = vadd.f32 %v862, %v863
        %v865 = vsel %vm284, %v644, 0.0
        %v866 = vadd.f32 %v864, %v865
        %v867 = vsel %vm284, %v645, 0.0
        %v868 = vadd.f32 %v866, %v867
        %v869 = vsel %vm284, %v646, 0.0
        %v870 = vadd.f32 %v868, %v869
        %v871 = vsel %vm284, %v647, 0.0
        %v872 = vadd.f32 %v870, %v871
        %v873 = vsel %vm284, %v648, 0.0
        %v874 = vadd.f32 %v872, %v873
        %v875 = vsel %vm284, %v649, 0.0
        %v876 = vadd.f32 %v874, %v875
        %v877 = vsel %vm284, %v650, 0.0
        %v878 = vadd.f32 %v876, %v877
        %v879 = vsel %vm284, %v651, 0.0
        %v880 = vadd.f32 %v878, %v879
        %v881 = vsel %vm284, %v652, 0.0
        %v882 = vadd.f32 %v880, %v881
        %v883 = vsel %vm284, %v653, 0.0
        %v884 = vadd.f32 %v882, %v883
        %v885 = vsel %vm284, %v654, 0.0
        %v886 = vadd.f32 %v884, %v885
        %v887 = vsel %vm284, %v655, 0.0
        %v888 = vadd.f32 %v886, %v887
        %v889 = vsel %vm284, %v656, 0.0
        %v890 = vadd.f32 %v888, %v889
        %v891 = vsel %vm284, %v657, 0.0
        %v892 = vadd.f32 %v890, %v891
        %v893 = vsel %vm284, %v658, 0.0
        %v894 = vadd.f32 %v892, %v893
        %v895 = vsel %vm284, %v659, 0.0
        %v896 = vadd.f32 %v894, %v895
        %v897 = vsel %vm284, %v660, 0.0
        %v898 = vadd.f32 %v896, %v897
        %v899 = vsel %vm284, %v661, 0.0
        %v900 = vadd.f32 %v898, %v899
        %v901 = vsel %vm284, %v662, 0.0
        %v902 = vadd.f32 %v900, %v901
        %v903 = vsel %vm284, %v663, 0.0
        %v904 = vadd.f32 %v902, %v903
        %v905 = vsel %vm284, %v664, 0.0
        %v906 = vadd.f32 %v904, %v905
        %v907 = vsel %vm284, %v665, 0.0
        %v908 = vadd.f32 %v906, %v907
        %v909 = vsel %vm284, %v666, 0.0
        %v910 = vadd.f32 %v908, %v909
        %v911 = vsel %vm284, %v667, 0.0
        %v912 = vadd.f32 %v910, %v911
        %v913 = vsel %vm284, %v668, 0.0
        %v914 = vadd.f32 %v912, %v913
        %v915 = vsel %vm284, %v669, 0.0
        %v916 = vadd.f32 %v914, %v915
        %v917 = vsel %vm284, %v670, 0.0
        %v918 = vadd.f32 %v916, %v917
        %v919 = vsel %vm284, %v671, 0.0
        %v920 = vadd.f32 %v918, %v919
        %v921 = vsel %vm284, %v672, 0.0
        %v922 = vadd.f32 %v920, %v921
        %v923 = vsel %vm284, %v673, 0.0
        %v924 = vadd.f32 %v922, %v923
        %v925 = vsel %vm284, %v674, 0.0
        %v926 = vadd.f32 %v924, %v925
        %v927 = vsel %vm284, %v675, 0.0
        %v928 = vadd.f32 %v926, %v927
        %v929 = vsel %vm284, %v676, 0.0
        %v930 = vadd.f32 %v928, %v929
        %v931 = vsel %vm284, %v677, 0.0
        %v932 = vadd.f32 %v930, %v931
        %v933 = vrot.slane %v932, 4
        %v934 = vadd.f32 %v932, %v933
        %v935 = vrot.slane %v934, 2
        %v936 = vadd.f32 %v934, %v935
        %v937 = vrot.slane %v936, 1
        %v938 = vadd.f32 %v936, %v937
        %v939 = vadd.f32 %v549, %v938
        %940 = vst.msk [vmem:[%s2] sm:$0x1] %vm547, %v939
        // Predicated region
        $region33: #{bn_ac_conv3d.2} parent=23 // pred_check
          %p941 = pneg %p56
        $region34: #{bn_ac_conv3d.2} parent=23 // pred_check_branch
          %943 = sbr.rel (%p941) target = $region36
        $region35: #{bn_ac_conv3d.2} parent=23 // pred_region
          _
        $region36: #{bn_ac_conv3d.2} parent=23 // pred_fallthru
          _
        // Predicated region
        $region37: #{bn_ac_conv3d.2} parent=23 // pred_check
          %p944 = pneg %p77
        $region38: #{bn_ac_conv3d.2} parent=23 // pred_check_branch
          %946 = sbr.rel (%p944) target = $region40
        $region39: #{bn_ac_conv3d.2} parent=23 // pred_region
          _
        $region40: #{bn_ac_conv3d.2} parent=23 // pred_fallthru
          _
        // Predicated region
        $region41: #{bn_ac_conv3d.2} parent=23 // pred_check
          %p947 = pneg %p56
        $region42: #{bn_ac_conv3d.2} parent=23 // pred_check_branch
          %949 = sbr.rel (%p947) target = $region44
        $region43: #{bn_ac_conv3d.2} parent=23 // pred_region
          _
        $region44: #{bn_ac_conv3d.2} parent=23 // pred_fallthru
          _
        // Predicated region
        $region45: #{bn_ac_conv3d.2} parent=23 // pred_check
          %p950 = pneg %p77
        $region46: #{bn_ac_conv3d.2} parent=23 // pred_check_branch
          %952 = sbr.rel (%p950) target = $region48
        $region47: #{bn_ac_conv3d.2} parent=23 // pred_region
          _
        $region48: #{bn_ac_conv3d.2} parent=23 // pred_fallthru
          _
      $region24: #{bn_ac_conv3d.2} parent=5 // pred_fallthru
        _
      %p953 = scmp.le.s32.totalorder 2, %s12
      // Predicated region
      $region49: #{bn_ac_conv3d.2} parent=5 // pred_check
        %p954 = pneg %p953
      $region50: #{bn_ac_conv3d.2} parent=5 // pred_check_branch
        %956 = sbr.rel (%p954) target = $region52
      $region51: #{bn_ac_conv3d.2} parent=5 // pred_region
        %s957 = ssub.s32 %s12, 2
      $region52: #{bn_ac_conv3d.2} parent=5 // pred_fallthru
        _
    $region6: #{bn_ac_conv3d.2} parent=1 // loop_footer
      %s16 = sadd.s32 1, %s12
    $region7: #{bn_ac_conv3d.2} parent=1 // loop_footer_branch
      %11 = sbr.rel target = $region3
    $region8: #{bn_ac_conv3d.2} parent=1 // loop_exit
      _
    %958 = vsyncpa [#allocation3], 1
    %s959 = scalar_lea.sflag [#allocation3], 1
    %960 = vsyncpa %s959, 1

// kernel: bn_ac_conv3d.3
$region0: #{bn_ac_conv3d.3}
  #allocation0 [shape = 'u32[]', space=smem, size = 0x4, offset = 0x4, fixed_abs, tag = 'smem constant byte address 0x4 - core index']
  #allocation1 [shape = 'u32[144,128]{1,0:T(1,128)}', space=vmem, size = 0x12000, scoped, tag = 'internal scratch']
  %s0 = inlined_call_operand.vmem [shape: f32[1,4096,32], index: 0, kind: input, shape index: {}]
  %s1 = inlined_call_operand.vmem [shape: f32[1,1,32], index: 1, kind: input, shape index: {}]
  %s2 = inlined_call_operand.vmem [shape: f32[1,1,32], index: 2, kind: input, shape index: {}]
  %s3 = inlined_call_operand.vmem [shape: bf16[1,32,64], index: 3, kind: input, shape index: {}]
  %s4 = inlined_call_operand.hbm [shape: f32[1,4096,64], index: 4, kind: output, shape index: {}]
  %s5 = sld [smem:[#allocation0]]
  $region53: #{bn_ac_conv3d.3} parent=0
    _
  %s7 = ssub.s32 1, %s5
  %s8 = scalar_select 0, %s7, %s5
  $region1: #{bn_ac_conv3d.3} parent=0
    #allocation2 [shape = 'u8[524288]{0}', space=vmem, size = 0x80000, scoped, tag = 'output window, operand 0']
    #allocation3 [shape = 's32[2]{0}', space=sflag, size = 0x8, scoped, tag = 'scoped memory for bn_ac_conv3d.3']
    %9 = vsyncpa [#allocation3], 0
    %s10 = scalar_lea.sflag [#allocation3], 1
    %11 = vsyncpa %s10, 0
    loop: start=0, step=1, limit=10
    $region2: #{bn_ac_conv3d.3} parent=1 // loop_pre_header
      _
    $region3: #{bn_ac_conv3d.3} parent=1 // loop_header
      %s13 = sphi 0, %s17
      %p14 = scmp.ge.s32.totalorder %s13, 10
      %s20 = sphi 0, %s39
      %s21 = sphi 0, %s35
      %s22 = sphi 0, %s31
      %s23 = sphi 0, %s20
      %s24 = sphi 0, %s21
      %s25 = sphi 0, %s22
      %s26 = sphi 0, %s23
      %s27 = sphi 0, %s24
      %s28 = sphi 0, %s25
      %s46 = sphi 0, %s48
      %s49 = sphi 0, %s46
      %s50 = sphi 0, %s49
      %s66 = sphi 0, %s50
      %s74 = sphi 0, %s76
      %s77 = sphi 0, %s74
      %s78 = sphi 0, %s77
      %s94 = sphi 0, %s78
      %s102 = sphi 0, %s104
      %s105 = sphi 0, %s102
      %s106 = sphi 0, %s105
      %s122 = sphi 0, %s106
      %s130 = sphi 0, %s132
      %s133 = sphi 0, %s130
      %s134 = sphi 0, %s133
      %s150 = sphi 0, %s134
      %s158 = sphi 0, %s160
      %s161 = sphi 0, %s158
      %s162 = sphi 0, %s161
      %s178 = sphi 0, %s162
    $region4: #{bn_ac_conv3d.3} parent=1 // loop_header_branch
      %16 = sbr.rel (%p14) target = $region8
    $region5: #{bn_ac_conv3d.3} parent=1 // loop_body
      %s18 = ssub.s32 %s13, 1
      %s19 = ssub.s32 %s13, 2
      %s29 = sadd.s32 1, %s22
      %p30 = scmp.ge.s32.totalorder %s29, 1
      %s31 = scalar_select %p30, 0, %s29
      %s32 = sadd.s32 1, %s21
      %s33 = scalar_select %p30, %s32, %s21
      %p34 = scmp.ge.s32.totalorder %s33, 8
      %s35 = scalar_select %p34, 0, %s33
      %s36 = sadd.s32 1, %s20
      %s37 = scalar_select %p34, %s36, %s20
      %p38 = scmp.ge.s32.totalorder %s37, 1
      %s39 = scalar_select %p38, 0, %s37
      %s40 = ssub.s32 %s20, %s39
      %s41 = ssub.s32 %s21, %s35
      %s42 = sor.u32 %s40, %s41
      %s43 = ssub.s32 %s22, %s31
      %s44 = sor.u32 %s42, %s43
      %p45 = scmp.eq.s32.totalorder %s44, 0
      %s47 = sadd.s32 %s46, 1
      %s48 = scalar_select %p45, %s46, %s47
      %p51 = pneg %p45
      %p52 = scmp.eq.s32.totalorder %s13, 7
      %p53 = por %p51, %p52
      %p54 = scmp.ne.s32.totalorder %s46, %s49
      %p55 = scmp.eq.s32.totalorder %s13, 0
      %p56 = por %p54, %p55
      %p57 = scmp.ne.s32.totalorder %s46, %s49
      %p58 = scmp.eq.s32.totalorder %s18, 7
      %p59 = por %p57, %p58
      %p60 = scmp.ne.s32.totalorder %s49, %s50
      %p61 = scmp.eq.s32.totalorder %s18, 0
      %p62 = por %p60, %p61
      %p63 = scmp.ne.s32.totalorder %s49, %s50
      %p64 = scmp.eq.s32.totalorder %s19, 7
      %p65 = por %p63, %p64
      %p67 = scmp.ne.s32.totalorder %s50, %s66
      %p68 = scmp.eq.s32.totalorder %s19, 0
      %p69 = por %p67, %p68
      %s70 = ssub.s32 %s20, %s39
      %s71 = ssub.s32 %s22, %s31
      %s72 = sor.u32 %s70, %s71
      %p73 = scmp.eq.s32.totalorder %s72, 0
      %s75 = sadd.s32 %s74, 1
      %s76 = scalar_select %p73, %s74, %s75
      %p79 = pneg %p73
      %p80 = scmp.eq.s32.totalorder %s13, 7
      %p81 = por %p79, %p80
      %p82 = scmp.ne.s32.totalorder %s74, %s77
      %p83 = scmp.eq.s32.totalorder %s13, 0
      %p84 = por %p82, %p83
      %p85 = scmp.ne.s32.totalorder %s74, %s77
      %p86 = scmp.eq.s32.totalorder %s18, 7
      %p87 = por %p85, %p86
      %p88 = scmp.ne.s32.totalorder %s77, %s78
      %p89 = scmp.eq.s32.totalorder %s18, 0
      %p90 = por %p88, %p89
      %p91 = scmp.ne.s32.totalorder %s77, %s78
      %p92 = scmp.eq.s32.totalorder %s19, 7
      %p93 = por %p91, %p92
      %p95 = scmp.ne.s32.totalorder %s78, %s94
      %p96 = scmp.eq.s32.totalorder %s19, 0
      %p97 = por %p95, %p96
      %s98 = ssub.s32 %s20, %s39
      %s99 = ssub.s32 %s22, %s31
      %s100 = sor.u32 %s98, %s99
      %p101 = scmp.eq.s32.totalorder %s100, 0
      %s103 = sadd.s32 %s102, 1
      %s104 = scalar_select %p101, %s102, %s103
      %p107 = pneg %p101
      %p108 = scmp.eq.s32.totalorder %s13, 7
      %p109 = por %p107, %p108
      %p110 = scmp.ne.s32.totalorder %s102, %s105
      %p111 = scmp.eq.s32.totalorder %s13, 0
      %p112 = por %p110, %p111
      %p113 = scmp.ne.s32.totalorder %s102, %s105
      %p114 = scmp.eq.s32.totalorder %s18, 7
      %p115 = por %p113, %p114
      %p116 = scmp.ne.s32.totalorder %s105, %s106
      %p117 = scmp.eq.s32.totalorder %s18, 0
      %p118 = por %p116, %p117
      %p119 = scmp.ne.s32.totalorder %s105, %s106
      %p120 = scmp.eq.s32.totalorder %s19, 7
      %p121 = por %p119, %p120
      %p123 = scmp.ne.s32.totalorder %s106, %s122
      %p124 = scmp.eq.s32.totalorder %s19, 0
      %p125 = por %p123, %p124
      %s126 = ssub.s32 %s20, %s39
      %s127 = ssub.s32 %s22, %s31
      %s128 = sor.u32 %s126, %s127
      %p129 = scmp.eq.s32.totalorder %s128, 0
      %s131 = sadd.s32 %s130, 1
      %s132 = scalar_select %p129, %s130, %s131
      %p135 = pneg %p129
      %p136 = scmp.eq.s32.totalorder %s13, 7
      %p137 = por %p135, %p136
      %p138 = scmp.ne.s32.totalorder %s130, %s133
      %p139 = scmp.eq.s32.totalorder %s13, 0
      %p140 = por %p138, %p139
      %p141 = scmp.ne.s32.totalorder %s130, %s133
      %p142 = scmp.eq.s32.totalorder %s18, 7
      %p143 = por %p141, %p142
      %p144 = scmp.ne.s32.totalorder %s133, %s134
      %p145 = scmp.eq.s32.totalorder %s18, 0
      %p146 = por %p144, %p145
      %p147 = scmp.ne.s32.totalorder %s133, %s134
      %p148 = scmp.eq.s32.totalorder %s19, 7
      %p149 = por %p147, %p148
      %p151 = scmp.ne.s32.totalorder %s134, %s150
      %p152 = scmp.eq.s32.totalorder %s19, 0
      %p153 = por %p151, %p152
      %s154 = ssub.s32 %s20, %s39
      %s155 = ssub.s32 %s21, %s35
      %s156 = sor.u32 %s154, %s155
      %p157 = scmp.eq.s32.totalorder %s156, 0
      %s159 = sadd.s32 %s158, 1
      %s160 = scalar_select %p157, %s158, %s159
      %p163 = pneg %p157
      %p164 = scmp.eq.s32.totalorder %s13, 7
      %p165 = por %p163, %p164
      %p166 = scmp.ne.s32.totalorder %s158, %s161
      %p167 = scmp.eq.s32.totalorder %s13, 0
      %p168 = por %p166, %p167
      %p169 = scmp.ne.s32.totalorder %s158, %s161
      %p170 = scmp.eq.s32.totalorder %s18, 7
      %p171 = por %p169, %p170
      %p172 = scmp.ne.s32.totalorder %s161, %s162
      %p173 = scmp.eq.s32.totalorder %s18, 0
      %p174 = por %p172, %p173
      %p175 = scmp.ne.s32.totalorder %s161, %s162
      %p176 = scmp.eq.s32.totalorder %s19, 7
      %p177 = por %p175, %p176
      %p179 = scmp.ne.s32.totalorder %s162, %s178
      %p180 = scmp.eq.s32.totalorder %s19, 0
      %p181 = por %p179, %p180
      %p182 = scmp.le.s32.totalorder 1, %s13
      %p183 = scmp.lt.s32.totalorder %s13, 9
      %p184 = pnand %p182, %p183
      %p185 = pneg %p184
      // Predicated region
      $region9: #{bn_ac_conv3d.3} parent=5 // pred_check
        _
      $region10: #{bn_ac_conv3d.3} parent=5 // pred_check_branch
        %187 = sbr.rel (%p184) target = $region12
      $region11: #{bn_ac_conv3d.3} parent=5 // pred_region
        %s188 = ssub.s32 %s13, 1
        // Predicated region
        $region13: #{bn_ac_conv3d.3} parent=11 // pred_check
          %p189 = pneg %p90
        $region14: #{bn_ac_conv3d.3} parent=11 // pred_check_branch
          %191 = sbr.rel (%p189) target = $region16
        $region15: #{bn_ac_conv3d.3} parent=11 // pred_region
          %p192 = scmp.lt.s32.totalorder %s23, 0
          %s193 = scalar_select %p192, %s23, 0
          %p194 = scmp.lt.s32.totalorder %s25, 0
          %s195 = scalar_select %p194, %s25, 0
          %s196 = sadd.s32 %s195, %s193
          %s197 = scalar_lea.vmem %s1, %s196
        $region16: #{bn_ac_conv3d.3} parent=11 // pred_fallthru
          _
        // Predicated region
        $region17: #{bn_ac_conv3d.3} parent=11 // pred_check
          %p198 = pneg %p118
        $region18: #{bn_ac_conv3d.3} parent=11 // pred_check_branch
          %200 = sbr.rel (%p198) target = $region20
        $region19: #{bn_ac_conv3d.3} parent=11 // pred_region
          %p201 = scmp.lt.s32.totalorder %s23, 0
          %s202 = scalar_select %p201, %s23, 0
          %p203 = scmp.lt.s32.totalorder %s25, 0
          %s204 = scalar_select %p203, %s25, 0
          %s205 = sadd.s32 %s204, %s202
          %s206 = scalar_lea.vmem %s2, %s205
        $region20: #{bn_ac_conv3d.3} parent=11 // pred_fallthru
          _
        // Predicated region
        $region21: #{bn_ac_conv3d.3} parent=11 // pred_check
          %p207 = pneg %p146
        $region22: #{bn_ac_conv3d.3} parent=11 // pred_check_branch
          %209 = sbr.rel (%p207) target = $region24
        $region23: #{bn_ac_conv3d.3} parent=11 // pred_region
          %s210 = smul.u32 4, %s25
          %p211 = scmp.lt.s32.totalorder %s23, 0
          %s212 = scalar_select %p211, %s23, 0
          %p213 = scmp.lt.s32.totalorder %s210, 3
          %s214 = scalar_select %p213, %s210, 3
          %s215 = smul.addr %s212, 4
          %s216 = sadd.s32 %s214, %s215
          %s217 = smul.addr %s216, 4
          %s218 = scalar_lea.vmem %s3, %s217
          %s219 = smul.u32 4, %s25
        $region24: #{bn_ac_conv3d.3} parent=11 // pred_fallthru
          _
      $region12: #{bn_ac_conv3d.3} parent=5 // pred_fallthru
        _
      %p220 = scmp.lt.s32.totalorder %s13, 8
      // Predicated region
      $region25: #{bn_ac_conv3d.3} parent=5 // pred_check
        %p221 = pneg %p220
      $region26: #{bn_ac_conv3d.3} parent=5 // pred_check_branch
        %223 = sbr.rel (%p221) target = $region28
      $region27: #{bn_ac_conv3d.3} parent=5 // pred_region
        // Predicated region
        $region29: #{bn_ac_conv3d.3} parent=27 // pred_check
          %p224 = pneg %p56
        $region30: #{bn_ac_conv3d.3} parent=27 // pred_check_branch
          %226 = sbr.rel (%p224) target = $region32
        $region31: #{bn_ac_conv3d.3} parent=27 // pred_region
          %s227 = smul.u32 64, %s21
          %p228 = scmp.lt.s32.totalorder %s20, 0
          %s229 = scalar_select %p228, %s20, 0
          %p230 = scmp.lt.s32.totalorder %s227, 511
          %s231 = scalar_select %p230, %s227, 511
          %p232 = scmp.lt.s32.totalorder %s22, 0
          %s233 = scalar_select %p232, %s22, 0
          %s234 = sadd.s32 %s233, %s231
          %s235 = smul.addr %s229, 512
          %s236 = sadd.s32 %s234, %s235
          %s237 = smul.addr %s236, 8
          %s238 = scalar_lea.vmem %s0, %s237
          %s239 = smul.u32 64, %s21
        $region32: #{bn_ac_conv3d.3} parent=27 // pred_fallthru
          _
      $region28: #{bn_ac_conv3d.3} parent=5 // pred_fallthru
        _
      %p240 = scmp.le.s32.totalorder 1, %s13
      %p241 = scmp.lt.s32.totalorder %s13, 9
      %p242 = pnand %p240, %p241
      %p243 = pneg %p242
      // Predicated region
      $region33: #{bn_ac_conv3d.3} parent=5 // pred_check
        _
      $region34: #{bn_ac_conv3d.3} parent=5 // pred_check_branch
        %245 = sbr.rel (%p242) target = $region36
      $region35: #{bn_ac_conv3d.3} parent=5 // pred_region
        %s246 = ssub.s32 %s13, 1
        %s247 = smul.u32 64, %s24
        %p248 = scmp.lt.s32.totalorder %s23, 0
        %s249 = scalar_select %p248, %s23, 0
        %p250 = scmp.lt.s32.totalorder %s247, 511
        %s251 = scalar_select %p250, %s247, 511
        %p252 = scmp.lt.s32.totalorder %s25, 0
        %s253 = scalar_select %p252, %s25, 0
        %s254 = sadd.s32 %s253, %s251
        %s255 = smul.addr %s249, 512
        %s256 = sadd.s32 %s254, %s255
        %s257 = smul.addr %s256, 8
        %s258 = scalar_lea.vmem %s0, %s257
        %p259 = pneg %p62
        %p260 = pneg %p59
        %p261 = scmp.lt.s32.totalorder %s23, 0
        %s262 = scalar_select %p261, %s23, 0
        %p263 = scmp.lt.s32.totalorder %s25, 0
        %s264 = scalar_select %p263, %s25, 0
        %s265 = sadd.s32 %s264, %s262
        %s266 = scalar_lea.vmem %s1, %s265
        %p267 = pneg %p90
        %p268 = pneg %p87
        %p269 = scmp.lt.s32.totalorder %s23, 0
        %s270 = scalar_select %p269, %s23, 0
        %p271 = scmp.lt.s32.totalorder %s25, 0
        %s272 = scalar_select %p271, %s25, 0
        %s273 = sadd.s32 %s272, %s270
        %s274 = scalar_lea.vmem %s2, %s273
        %p275 = pneg %p118
        %p276 = pneg %p115
        %s277 = smul.u32 4, %s25
        %p278 = scmp.lt.s32.totalorder %s23, 0
        %s279 = scalar_select %p278, %s23, 0
        %p280 = scmp.lt.s32.totalorder %s277, 3
        %s281 = scalar_select %p280, %s277, 3
        %s282 = smul.addr %s279, 4
        %s283 = sadd.s32 %s281, %s282
        %s284 = smul.addr %s283, 4
        %s285 = scalar_lea.vmem %s3, %s284
        %p286 = pneg %p146
        %p287 = pneg %p143
        %p288 = pneg %p174
        %p289 = pneg %p171
        %s290 = sand.u32 %s161, 1
        %s291 = scalar_lea.sflag [#allocation3], %s290
        %s292 = sand.u32 %s161, 1
        %s293 = smul.addr %s292, 512
        %s294 = scalar_lea.vmem [#allocation2], %s293
        %s295 = smul.u32 64, %s24
        %p296 = scmp.lt.s32.totalorder %s23, 0
        %s297 = scalar_select %p296, %s23, 0
        %p298 = scmp.lt.s32.totalorder %s295, 511
        %s299 = scalar_select %p298, %s295, 511
        %p300 = scmp.lt.s32.totalorder %s25, 0
        %s301 = scalar_select %p300, %s25, 0
        %s302 = sadd.s32 %s301, %s299
        %s303 = smul.addr %s297, 512
        %s304 = sadd.s32 %s302, %s303
        %s305 = smul.addr %s304, 8
        %s306 = scalar_lea.vmem %s0, %s305
        %s307 = smul.u32 64, %s24
        %p308 = scmp.lt.s32.totalorder %s23, 0
        %s309 = scalar_select %p308, %s23, 0
        %p310 = scmp.lt.s32.totalorder %s25, 0
        %s311 = scalar_select %p310, %s25, 0
        %s312 = sadd.s32 %s311, %s309
        %s313 = scalar_lea.vmem %s1, %s312
        %p314 = scmp.lt.s32.totalorder %s23, 0
        %s315 = scalar_select %p314, %s23, 0
        %p316 = scmp.lt.s32.totalorder %s25, 0
        %s317 = scalar_select %p316, %s25, 0
        %s318 = sadd.s32 %s317, %s315
        %s319 = scalar_lea.vmem %s2, %s318
        %s320 = smul.u32 4, %s25
        %p321 = scmp.lt.s32.totalorder %s23, 0
        %s322 = scalar_select %p321, %s23, 0
        %p323 = scmp.lt.s32.totalorder %s320, 3
        %s324 = scalar_select %p323, %s320, 3
        %s325 = smul.addr %s322, 4
        %s326 = sadd.s32 %s324, %s325
        %s327 = smul.addr %s326, 4
        %s328 = scalar_lea.vmem %s3, %s327
        %s329 = smul.u32 4, %s25
        %s330 = smul.u32 64, %s24
        %p332 = scmp.eq.s32.totalorder %s25, 0
        // Predicated region
        $region37: #{bn_ac_conv3d.3} parent=35 // pred_check
          %p333 = pneg %p332
        $region38: #{bn_ac_conv3d.3} parent=35 // pred_check_branch
          %335 = sbr.rel (%p333) target = $region40
        $region39: #{bn_ac_conv3d.3} parent=35 // pred_region
          %vm336 = vcmask 523264
          %337 = vst.msk [vmem:[%s294] sm:$0xff] %vm336, 0.0
          %338 = vst.msk [vmem:[%s294 + $0x8] sm:$0xff] %vm336, 0.0
          %339 = vst.msk [vmem:[%s294 + $0x10] sm:$0xff] %vm336, 0.0
          %340 = vst.msk [vmem:[%s294 + $0x18] sm:$0xff] %vm336, 0.0
          %341 = vst.msk [vmem:[%s294 + $0x20] sm:$0xff] %vm336, 0.0
          %342 = vst.msk [vmem:[%s294 + $0x28] sm:$0xff] %vm336, 0.0
          %343 = vst.msk [vmem:[%s294 + $0x30] sm:$0xff] %vm336, 0.0
          %344 = vst.msk [vmem:[%s294 + $0x38] sm:$0xff] %vm336, 0.0
          %345 = vst.msk [vmem:[%s294 + $0x40] sm:$0xff] %vm336, 0.0
          %346 = vst.msk [vmem:[%s294 + $0x48] sm:$0xff] %vm336, 0.0
          %347 = vst.msk [vmem:[%s294 + $0x50] sm:$0xff] %vm336, 0.0
          %348 = vst.msk [vmem:[%s294 + $0x58] sm:$0xff] %vm336, 0.0
          %349 = vst.msk [vmem:[%s294 + $0x60] sm:$0xff] %vm336, 0.0
          %350 = vst.msk [vmem:[%s294 + $0x68] sm:$0xff] %vm336, 0.0
          %351 = vst.msk [vmem:[%s294 + $0x70] sm:$0xff] %vm336, 0.0
          %352 = vst.msk [vmem:[%s294 + $0x78] sm:$0xff] %vm336, 0.0
          %353 = vst.msk [vmem:[%s294 + $0x80] sm:$0xff] %vm336, 0.0
          %354 = vst.msk [vmem:[%s294 + $0x88] sm:$0xff] %vm336, 0.0
          %355 = vst.msk [vmem:[%s294 + $0x90] sm:$0xff] %vm336, 0.0
          %356 = vst.msk [vmem:[%s294 + $0x98] sm:$0xff] %vm336, 0.0
          %357 = vst.msk [vmem:[%s294 + $0xa0] sm:$0xff] %vm336, 0.0
          %358 = vst.msk [vmem:[%s294 + $0xa8] sm:$0xff] %vm336, 0.0
          %359 = vst.msk [vmem:[%s294 + $0xb0] sm:$0xff] %vm336, 0.0
          %360 = vst.msk [vmem:[%s294 + $0xb8] sm:$0xff] %vm336, 0.0
          %361 = vst.msk [vmem:[%s294 + $0xc0] sm:$0xff] %vm336, 0.0
          %362 = vst.msk [vmem:[%s294 + $0xc8] sm:$0xff] %vm336, 0.0
          %363 = vst.msk [vmem:[%s294 + $0xd0] sm:$0xff] %vm336, 0.0
          %364 = vst.msk [vmem:[%s294 + $0xd8] sm:$0xff] %vm336, 0.0
          %365 = vst.msk [vmem:[%s294 + $0xe0] sm:$0xff] %vm336, 0.0
          %366 = vst.msk [vmem:[%s294 + $0xe8] sm:$0xff] %vm336, 0.0
          %367 = vst.msk [vmem:[%s294 + $0xf0] sm:$0xff] %vm336, 0.0
          %368 = vst.msk [vmem:[%s294 + $0xf8] sm:$0xff] %vm336, 0.0
          %369 = vst.msk [vmem:[%s294 + $0x100] sm:$0xff] %vm336, 0.0
          %370 = vst.msk [vmem:[%s294 + $0x108] sm:$0xff] %vm336, 0.0
          %371 = vst.msk [vmem:[%s294 + $0x110] sm:$0xff] %vm336, 0.0
          %372 = vst.msk [vmem:[%s294 + $0x118] sm:$0xff] %vm336, 0.0
          %373 = vst.msk [vmem:[%s294 + $0x120] sm:$0xff] %vm336, 0.0
          %374 = vst.msk [vmem:[%s294 + $0x128] sm:$0xff] %vm336, 0.0
          %375 = vst.msk [vmem:[%s294 + $0x130] sm:$0xff] %vm336, 0.0
          %376 = vst.msk [vmem:[%s294 + $0x138] sm:$0xff] %vm336, 0.0
          %377 = vst.msk [vmem:[%s294 + $0x140] sm:$0xff] %vm336, 0.0
          %378 = vst.msk [vmem:[%s294 + $0x148] sm:$0xff] %vm336, 0.0
          %379 = vst.msk [vmem:[%s294 + $0x150] sm:$0xff] %vm336, 0.0
          %380 = vst.msk [vmem:[%s294 + $0x158] sm:$0xff] %vm336, 0.0
          %381 = vst.msk [vmem:[%s294 + $0x160] sm:$0xff] %vm336, 0.0
          %382 = vst.msk [vmem:[%s294 + $0x168] sm:$0xff] %vm336, 0.0
          %383 = vst.msk [vmem:[%s294 + $0x170] sm:$0xff] %vm336, 0.0
          %384 = vst.msk [vmem:[%s294 + $0x178] sm:$0xff] %vm336, 0.0
          %385 = vst.msk [vmem:[%s294 + $0x180] sm:$0xff] %vm336, 0.0
          %386 = vst.msk [vmem:[%s294 + $0x188] sm:$0xff] %vm336, 0.0
          %387 = vst.msk [vmem:[%s294 + $0x190] sm:$0xff] %vm336, 0.0
          %388 = vst.msk [vmem:[%s294 + $0x198] sm:$0xff] %vm336, 0.0
          %389 = vst.msk [vmem:[%s294 + $0x1a0] sm:$0xff] %vm336, 0.0
          %390 = vst.msk [vmem:[%s294 + $0x1a8] sm:$0xff] %vm336, 0.0
          %391 = vst.msk [vmem:[%s294 + $0x1b0] sm:$0xff] %vm336, 0.0
          %392 = vst.msk [vmem:[%s294 + $0x1b8] sm:$0xff] %vm336, 0.0
          %393 = vst.msk [vmem:[%s294 + $0x1c0] sm:$0xff] %vm336, 0.0
          %394 = vst.msk [vmem:[%s294 + $0x1c8] sm:$0xff] %vm336, 0.0
          %395 = vst.msk [vmem:[%s294 + $0x1d0] sm:$0xff] %vm336, 0.0
          %396 = vst.msk [vmem:[%s294 + $0x1d8] sm:$0xff] %vm336, 0.0
          %397 = vst.msk [vmem:[%s294 + $0x1e0] sm:$0xff] %vm336, 0.0
          %398 = vst.msk [vmem:[%s294 + $0x1e8] sm:$0xff] %vm336, 0.0
          %399 = vst.msk [vmem:[%s294 + $0x1f0] sm:$0xff] %vm336, 0.0
          %400 = vst.msk [vmem:[%s294 + $0x1f8] sm:$0xff] %vm336, 0.0
        $region40: #{bn_ac_conv3d.3} parent=35 // pred_fallthru
          _
        %v401 = vld [vmem:[%s306] sm:$0xff]
        %v402 = vld [vmem:[%s306 + $0x8] sm:$0xff]
        %v403 = vld [vmem:[%s306 + $0x10] sm:$0xff]
        %v404 = vld [vmem:[%s306 + $0x18] sm:$0xff]
        %v405 = vld [vmem:[%s306 + $0x20] sm:$0xff]
        %v406 = vld [vmem:[%s306 + $0x28] sm:$0xff]
        %v407 = vld [vmem:[%s306 + $0x30] sm:$0xff]
        %v408 = vld [vmem:[%s306 + $0x38] sm:$0xff]
        %v409 = vld [vmem:[%s306 + $0x40] sm:$0xff]
        %v410 = vld [vmem:[%s306 + $0x48] sm:$0xff]
        %v411 = vld [vmem:[%s306 + $0x50] sm:$0xff]
        %v412 = vld [vmem:[%s306 + $0x58] sm:$0xff]
        %v413 = vld [vmem:[%s306 + $0x60] sm:$0xff]
        %v414 = vld [vmem:[%s306 + $0x68] sm:$0xff]
        %v415 = vld [vmem:[%s306 + $0x70] sm:$0xff]
        %v416 = vld [vmem:[%s306 + $0x78] sm:$0xff]
        %v417 = vld [vmem:[%s306 + $0x80] sm:$0xff]
        %v418 = vld [vmem:[%s306 + $0x88] sm:$0xff]
        %v419 = vld [vmem:[%s306 + $0x90] sm:$0xff]
        %v420 = vld [vmem:[%s306 + $0x98] sm:$0xff]
        %v421 = vld [vmem:[%s306 + $0xa0] sm:$0xff]
        %v422 = vld [vmem:[%s306 + $0xa8] sm:$0xff]
        %v423 = vld [vmem:[%s306 + $0xb0] sm:$0xff]
        %v424 = vld [vmem:[%s306 + $0xb8] sm:$0xff]
        %v425 = vld [vmem:[%s306 + $0xc0] sm:$0xff]
        %v426 = vld [vmem:[%s306 + $0xc8] sm:$0xff]
        %v427 = vld [vmem:[%s306 + $0xd0] sm:$0xff]
        %v428 = vld [vmem:[%s306 + $0xd8] sm:$0xff]
        %v429 = vld [vmem:[%s306 + $0xe0] sm:$0xff]
        %v430 = vld [vmem:[%s306 + $0xe8] sm:$0xff]
        %v431 = vld [vmem:[%s306 + $0xf0] sm:$0xff]
        %v432 = vld [vmem:[%s306 + $0xf8] sm:$0xff]
        %v433 = vld [vmem:[%s306 + $0x100] sm:$0xff]
        %v434 = vld [vmem:[%s306 + $0x108] sm:$0xff]
        %v435 = vld [vmem:[%s306 + $0x110] sm:$0xff]
        %v436 = vld [vmem:[%s306 + $0x118] sm:$0xff]
        %v437 = vld [vmem:[%s306 + $0x120] sm:$0xff]
        %v438 = vld [vmem:[%s306 + $0x128] sm:$0xff]
        %v439 = vld [vmem:[%s306 + $0x130] sm:$0xff]
        %v440 = vld [vmem:[%s306 + $0x138] sm:$0xff]
        %v441 = vld [vmem:[%s306 + $0x140] sm:$0xff]
        %v442 = vld [vmem:[%s306 + $0x148] sm:$0xff]
        %v443 = vld [vmem:[%s306 + $0x150] sm:$0xff]
        %v444 = vld [vmem:[%s306 + $0x158] sm:$0xff]
        %v445 = vld [vmem:[%s306 + $0x160] sm:$0xff]
        %v446 = vld [vmem:[%s306 + $0x168] sm:$0xff]
        %v447 = vld [vmem:[%s306 + $0x170] sm:$0xff]
        %v448 = vld [vmem:[%s306 + $0x178] sm:$0xff]
        %v449 = vld [vmem:[%s306 + $0x180] sm:$0xff]
        %v450 = vld [vmem:[%s306 + $0x188] sm:$0xff]
        %v451 = vld [vmem:[%s306 + $0x190] sm:$0xff]
        %v452 = vld [vmem:[%s306 + $0x198] sm:$0xff]
        %v453 = vld [vmem:[%s306 + $0x1a0] sm:$0xff]
        %v454 = vld [vmem:[%s306 + $0x1a8] sm:$0xff]
        %v455 = vld [vmem:[%s306 + $0x1b0] sm:$0xff]
        %v456 = vld [vmem:[%s306 + $0x1b8] sm:$0xff]
        %v457 = vld [vmem:[%s306 + $0x1c0] sm:$0xff]
        %v458 = vld [vmem:[%s306 + $0x1c8] sm:$0xff]
        %v459 = vld [vmem:[%s306 + $0x1d0] sm:$0xff]
        %v460 = vld [vmem:[%s306 + $0x1d8] sm:$0xff]
        %v461 = vld [vmem:[%s306 + $0x1e0] sm:$0xff]
        %v462 = vld [vmem:[%s306 + $0x1e8] sm:$0xff]
        %v463 = vld [vmem:[%s306 + $0x1f0] sm:$0xff]
        %v464 = vld [vmem:[%s306 + $0x1f8] sm:$0xff]
        %v465 = vld [vmem:[%s313] sm:$0x1]
        %v467 = vlaneseq
        %v468 = vshrl.u32 %v467, 7
        %v469 = vsub.s32 0, %v468
        %v470 = vrot.slane %v465, %v469
        %v472 = vmul.f32 %v401, %v470
        %v473 = vmul.f32 %v402, %v470
        %v474 = vmul.f32 %v403, %v470
        %v475 = vmul.f32 %v404, %v470
        %v476 = vmul.f32 %v405, %v470
        %v477 = vmul.f32 %v406, %v470
        %v478 = vmul.f32 %v407, %v470
        %v479 = vmul.f32 %v408, %v470
        %v480 = vmul.f32 %v409, %v470
        %v481 = vmul.f32 %v410, %v470
        %v482 = vmul.f32 %v411, %v470
        %v483 = vmul.f32 %v412, %v470
        %v484 = vmul.f32 %v413, %v470
        %v485 = vmul.f32 %v414, %v470
        %v486 = vmul.f32 %v415, %v470
        %v487 = vmul.f32 %v416, %v470
        %v488 = vmul.f32 %v417, %v470
        %v489 = vmul.f32 %v418, %v470
        %v490 = vmul.f32 %v419, %v470
        %v491 = vmul.f32 %v420, %v470
        %v492 = vmul.f32 %v421, %v470
        %v493 = vmul.f32 %v422, %v470
        %v494 = vmul.f32 %v423, %v470
        %v495 = vmul.f32 %v424, %v470
        %v496 = vmul.f32 %v425, %v470
        %v497 = vmul.f32 %v426, %v470
        %v498 = vmul.f32 %v427, %v470
        %v499 = vmul.f32 %v428, %v470
        %v500 = vmul.f32 %v429, %v470
        %v501 = vmul.f32 %v430, %v470
        %v502 = vmul.f32 %v431, %v470
        %v503 = vmul.f32 %v432, %v470
        %v504 = vmul.f32 %v433, %v470
        %v505 = vmul.f32 %v434, %v470
        %v506 = vmul.f32 %v435, %v470
        %v507 = vmul.f32 %v436, %v470
        %v508 = vmul.f32 %v437, %v470
        %v509 = vmul.f32 %v438, %v470
        %v510 = vmul.f32 %v439, %v470
        %v511 = vmul.f32 %v440, %v470
        %v512 = vmul.f32 %v441, %v470
        %v513 = vmul.f32 %v442, %v470
        %v514 = vmul.f32 %v443, %v470
        %v515 = vmul.f32 %v444, %v470
        %v516 = vmul.f32 %v445, %v470
        %v517 = vmul.f32 %v446, %v470
        %v518 = vmul.f32 %v447, %v470
        %v519 = vmul.f32 %v448, %v470
        %v520 = vmul.f32 %v449, %v470
        %v521 = vmul.f32 %v450, %v470
        %v522 = vmul.f32 %v451, %v470
        %v523 = vmul.f32 %v452, %v470
        %v524 = vmul.f32 %v453, %v470
        %v525 = vmul.f32 %v454, %v470
        %v526 = vmul.f32 %v455, %v470
        %v527 = vmul.f32 %v456, %v470
        %v528 = vmul.f32 %v457, %v470
        %v529 = vmul.f32 %v458, %v470
        %v530 = vmul.f32 %v459, %v470
        %v531 = vmul.f32 %v460, %v470
        %v532 = vmul.f32 %v461, %v470
        %v533 = vmul.f32 %v462, %v470
        %v534 = vmul.f32 %v463, %v470
        %v535 = vmul.f32 %v464, %v470
        %v536 = vld [vmem:[%s319] sm:$0x1]
        %v538 = vlaneseq
        %v539 = vshrl.u32 %v538, 7
        %v540 = vsub.s32 0, %v539
        %v541 = vrot.slane %v536, %v540
        %v543 = vadd.f32 %v472, %v541
        %v544 = vadd.f32 %v473, %v541
        %v545 = vadd.f32 %v474, %v541
        %v546 = vadd.f32 %v475, %v541
        %v547 = vadd.f32 %v476, %v541
        %v548 = vadd.f32 %v477, %v541
        %v549 = vadd.f32 %v478, %v541
        %v550 = vadd.f32 %v479, %v541
        %v551 = vadd.f32 %v480, %v541
        %v552 = vadd.f32 %v481, %v541
        %v553 = vadd.f32 %v482, %v541
        %v554 = vadd.f32 %v483, %v541
        %v555 = vadd.f32 %v484, %v541
        %v556 = vadd.f32 %v485, %v541
        %v557 = vadd.f32 %v486, %v541
        %v558 = vadd.f32 %v487, %v541
        %v559 = vadd.f32 %v488, %v541
        %v560 = vadd.f32 %v489, %v541
        %v561 = vadd.f32 %v490, %v541
        %v562 = vadd.f32 %v491, %v541
        %v563 = vadd.f32 %v492, %v541
        %v564 = vadd.f32 %v493, %v541
        %v565 = vadd.f32 %v494, %v541
        %v566 = vadd.f32 %v495, %v541
        %v567 = vadd.f32 %v496, %v541
        %v568 = vadd.f32 %v497, %v541
        %v569 = vadd.f32 %v498, %v541
        %v570 = vadd.f32 %v499, %v541
        %v571 = vadd.f32 %v500, %v541
        %v572 = vadd.f32 %v501, %v541
        %v573 = vadd.f32 %v502, %v541
        %v574 = vadd.f32 %v503, %v541
        %v575 = vadd.f32 %v504, %v541
        %v576 = vadd.f32 %v505, %v541
        %v577 = vadd.f32 %v506, %v541
        %v578 = vadd.f32 %v507, %v541
        %v579 = vadd.f32 %v508, %v541
        %v580 = vadd.f32 %v509, %v541
        %v581 = vadd.f32 %v510, %v541
        %v582 = vadd.f32 %v511, %v541
        %v583 = vadd.f32 %v512, %v541
        %v584 = vadd.f32 %v513, %v541
        %v585 = vadd.f32 %v514, %v541
        %v586 = vadd.f32 %v515, %v541
        %v587 = vadd.f32 %v516, %v541
        %v588 = vadd.f32 %v517, %v541
        %v589 = vadd.f32 %v518, %v541
        %v590 = vadd.f32 %v519, %v541
        %v591 = vadd.f32 %v520, %v541
        %v592 = vadd.f32 %v521, %v541
        %v593 = vadd.f32 %v522, %v541
        %v594 = vadd.f32 %v523, %v541
        %v595 = vadd.f32 %v524, %v541
        %v596 = vadd.f32 %v525, %v541
        %v597 = vadd.f32 %v526, %v541
        %v598 = vadd.f32 %v527, %v541
        %v599 = vadd.f32 %v528, %v541
        %v600 = vadd.f32 %v529, %v541
        %v601 = vadd.f32 %v530, %v541
        %v602 = vadd.f32 %v531, %v541
        %v603 = vadd.f32 %v532, %v541
        %v604 = vadd.f32 %v533, %v541
        %v605 = vadd.f32 %v534, %v541
        %v606 = vadd.f32 %v535, %v541
        %v607 = vmax.f32 %v543, 0.0
        %v608 = vmax.f32 %v544, 0.0
        %v609 = vmax.f32 %v545, 0.0
        %v610 = vmax.f32 %v546, 0.0
        %v611 = vmax.f32 %v547, 0.0
        %v612 = vmax.f32 %v548, 0.0
        %v613 = vmax.f32 %v549, 0.0
        %v614 = vmax.f32 %v550, 0.0
        %v615 = vmax.f32 %v551, 0.0
        %v616 = vmax.f32 %v552, 0.0
        %v617 = vmax.f32 %v553, 0.0
        %v618 = vmax.f32 %v554, 0.0
        %v619 = vmax.f32 %v555, 0.0
        %v620 = vmax.f32 %v556, 0.0
        %v621 = vmax.f32 %v557, 0.0
        %v622 = vmax.f32 %v558, 0.0
        %v623 = vmax.f32 %v559, 0.0
        %v624 = vmax.f32 %v560, 0.0
        %v625 = vmax.f32 %v561, 0.0
        %v626 = vmax.f32 %v562, 0.0
        %v627 = vmax.f32 %v563, 0.0
        %v628 = vmax.f32 %v564, 0.0
        %v629 = vmax.f32 %v565, 0.0
        %v630 = vmax.f32 %v566, 0.0
        %v631 = vmax.f32 %v567, 0.0
        %v632 = vmax.f32 %v568, 0.0
        %v633 = vmax.f32 %v569, 0.0
        %v634 = vmax.f32 %v570, 0.0
        %v635 = vmax.f32 %v571, 0.0
        %v636 = vmax.f32 %v572, 0.0
        %v637 = vmax.f32 %v573, 0.0
        %v638 = vmax.f32 %v574, 0.0
        %v639 = vmax.f32 %v575, 0.0
        %v640 = vmax.f32 %v576, 0.0
        %v641 = vmax.f32 %v577, 0.0
        %v642 = vmax.f32 %v578, 0.0
        %v643 = vmax.f32 %v579, 0.0
        %v644 = vmax.f32 %v580, 0.0
        %v645 = vmax.f32 %v581, 0.0
        %v646 = vmax.f32 %v582, 0.0
        %v647 = vmax.f32 %v583, 0.0
        %v648 = vmax.f32 %v584, 0.0
        %v649 = vmax.f32 %v585, 0.0
        %v650 = vmax.f32 %v586, 0.0
        %v651 = vmax.f32 %v587, 0.0
        %v652 = vmax.f32 %v588, 0.0
        %v653 = vmax.f32 %v589, 0.0
        %v654 = vmax.f32 %v590, 0.0
        %v655 = vmax.f32 %v591, 0.0
        %v656 = vmax.f32 %v592, 0.0
        %v657 = vmax.f32 %v593, 0.0
        %v658 = vmax.f32 %v594, 0.0
        %v659 = vmax.f32 %v595, 0.0
        %v660 = vmax.f32 %v596, 0.0
        %v661 = vmax.f32 %v597, 0.0
        %v662 = vmax.f32 %v598, 0.0
        %v663 = vmax.f32 %v599, 0.0
        %v664 = vmax.f32 %v600, 0.0
        %v665 = vmax.f32 %v601, 0.0
        %v666 = vmax.f32 %v602, 0.0
        %v667 = vmax.f32 %v603, 0.0
        %v668 = vmax.f32 %v604, 0.0
        %v669 = vmax.f32 %v605, 0.0
        %v670 = vmax.f32 %v606, 0.0
        %v671 = vld [vmem:[%s294] sm:$0xff]
        %v672 = vld [vmem:[%s294 + $0x8] sm:$0xff]
        %v673 = vld [vmem:[%s294 + $0x10] sm:$0xff]
        %v674 = vld [vmem:[%s294 + $0x18] sm:$0xff]
        %v675 = vld [vmem:[%s294 + $0x20] sm:$0xff]
        %v676 = vld [vmem:[%s294 + $0x28] sm:$0xff]
        %v677 = vld [vmem:[%s294 + $0x30] sm:$0xff]
        %v678 = vld [vmem:[%s294 + $0x38] sm:$0xff]
        %v679 = vld [vmem:[%s294 + $0x40] sm:$0xff]
        %v680 = vld [vmem:[%s294 + $0x48] sm:$0xff]
        %v681 = vld [vmem:[%s294 + $0x50] sm:$0xff]
        %v682 = vld [vmem:[%s294 + $0x58] sm:$0xff]
        %v683 = vld [vmem:[%s294 + $0x60] sm:$0xff]
        %v684 = vld [vmem:[%s294 + $0x68] sm:$0xff]
        %v685 = vld [vmem:[%s294 + $0x70] sm:$0xff]
        %v686 = vld [vmem:[%s294 + $0x78] sm:$0xff]
        %v687 = vld [vmem:[%s294 + $0x80] sm:$0xff]
        %v688 = vld [vmem:[%s294 + $0x88] sm:$0xff]
        %v689 = vld [vmem:[%s294 + $0x90] sm:$0xff]
        %v690 = vld [vmem:[%s294 + $0x98] sm:$0xff]
        %v691 = vld [vmem:[%s294 + $0xa0] sm:$0xff]
        %v692 = vld [vmem:[%s294 + $0xa8] sm:$0xff]
        %v693 = vld [vmem:[%s294 + $0xb0] sm:$0xff]
        %v694 = vld [vmem:[%s294 + $0xb8] sm:$0xff]
        %v695 = vld [vmem:[%s294 + $0xc0] sm:$0xff]
        %v696 = vld [vmem:[%s294 + $0xc8] sm:$0xff]
        %v697 = vld [vmem:[%s294 + $0xd0] sm:$0xff]
        %v698 = vld [vmem:[%s294 + $0xd8] sm:$0xff]
        %v699 = vld [vmem:[%s294 + $0xe0] sm:$0xff]
        %v700 = vld [vmem:[%s294 + $0xe8] sm:$0xff]
        %v701 = vld [vmem:[%s294 + $0xf0] sm:$0xff]
        %v702 = vld [vmem:[%s294 + $0xf8] sm:$0xff]
        %v703 = vld [vmem:[%s294 + $0x100] sm:$0xff]
        %v704 = vld [vmem:[%s294 + $0x108] sm:$0xff]
        %v705 = vld [vmem:[%s294 + $0x110] sm:$0xff]
        %v706 = vld [vmem:[%s294 + $0x118] sm:$0xff]
        %v707 = vld [vmem:[%s294 + $0x120] sm:$0xff]
        %v708 = vld [vmem:[%s294 + $0x128] sm:$0xff]
        %v709 = vld [vmem:[%s294 + $0x130] sm:$0xff]
        %v710 = vld [vmem:[%s294 + $0x138] sm:$0xff]
        %v711 = vld [vmem:[%s294 + $0x140] sm:$0xff]
        %v712 = vld [vmem:[%s294 + $0x148] sm:$0xff]
        %v713 = vld [vmem:[%s294 + $0x150] sm:$0xff]
        %v714 = vld [vmem:[%s294 + $0x158] sm:$0xff]
        %v715 = vld [vmem:[%s294 + $0x160] sm:$0xff]
        %v716 = vld [vmem:[%s294 + $0x168] sm:$0xff]
        %v717 = vld [vmem:[%s294 + $0x170] sm:$0xff]
        %v718 = vld [vmem:[%s294 + $0x178] sm:$0xff]
        %v719 = vld [vmem:[%s294 + $0x180] sm:$0xff]
        %v720 = vld [vmem:[%s294 + $0x188] sm:$0xff]
        %v721 = vld [vmem:[%s294 + $0x190] sm:$0xff]
        %v722 = vld [vmem:[%s294 + $0x198] sm:$0xff]
        %v723 = vld [vmem:[%s294 + $0x1a0] sm:$0xff]
        %v724 = vld [vmem:[%s294 + $0x1a8] sm:$0xff]
        %v725 = vld [vmem:[%s294 + $0x1b0] sm:$0xff]
        %v726 = vld [vmem:[%s294 + $0x1b8] sm:$0xff]
        %v727 = vld [vmem:[%s294 + $0x1c0] sm:$0xff]
        %v728 = vld [vmem:[%s294 + $0x1c8] sm:$0xff]
        %v729 = vld [vmem:[%s294 + $0x1d0] sm:$0xff]
        %v730 = vld [vmem:[%s294 + $0x1d8] sm:$0xff]
        %v731 = vld [vmem:[%s294 + $0x1e0] sm:$0xff]
        %v732 = vld [vmem:[%s294 + $0x1e8] sm:$0xff]
        %v733 = vld [vmem:[%s294 + $0x1f0] sm:$0xff]
        %v734 = vld [vmem:[%s294 + $0x1f8] sm:$0xff]
        %v735 = vpack.c.bf16 %v608, %v607
        %v736 = vpack.c.bf16 %v610, %v609
        %v737 = vpack.c.bf16 %v612, %v611
        %v738 = vpack.c.bf16 %v614, %v613
        %v739 = vpack.c.bf16 %v616, %v615
        %v740 = vpack.c.bf16 %v618, %v617
        %v741 = vpack.c.bf16 %v620, %v619
        %v742 = vpack.c.bf16 %v622, %v621
        %v743 = vpack.c.bf16 %v624, %v623
        %v744 = vpack.c.bf16 %v626, %v625
        %v745 = vpack.c.bf16 %v628, %v627
        %v746 = vpack.c.bf16 %v630, %v629
        %v747 = vpack.c.bf16 %v632, %v631
        %v748 = vpack.c.bf16 %v634, %v633
        %v749 = vpack.c.bf16 %v636, %v635
        %v750 = vpack.c.bf16 %v638, %v637
        %v751 = vpack.c.bf16 %v640, %v639
        %v752 = vpack.c.bf16 %v642, %v641
        %v753 = vpack.c.bf16 %v644, %v643
        %v754 = vpack.c.bf16 %v646, %v645
        %v755 = vpack.c.bf16 %v648, %v647
        %v756 = vpack.c.bf16 %v650, %v649
        %v757 = vpack.c.bf16 %v652, %v651
        %v758 = vpack.c.bf16 %v654, %v653
        %v759 = vpack.c.bf16 %v656, %v655
        %v760 = vpack.c.bf16 %v658, %v657
        %v761 = vpack.c.bf16 %v660, %v659
        %v762 = vpack.c.bf16 %v662, %v661
        %v763 = vpack.c.bf16 %v664, %v663
        %v764 = vpack.c.bf16 %v666, %v665
        %v765 = vpack.c.bf16 %v668, %v667
        %v766 = vpack.c.bf16 %v670, %v669
        %v767 = vld [vmem:[%s328] sm:$0xf]
        %v768 = vld [vmem:[%s328 + $0x4] sm:$0xf]
        %v769 = vld [vmem:[%s328 + $0x8] sm:$0xf]
        %v770 = vld [vmem:[%s328 + $0xc] sm:$0xf]
        %v775 = vunpack.c.l.b16 %v767
        %v776 = vunpack.c.l.b16 %v768
        %v777 = vunpack.c.l.b16 %v769
        %v778 = vunpack.c.l.b16 %v770
        %v779 = vpack.c.b16 %v776, %v775
        %v780 = vpack.c.b16 %v778, %v777
        %vm783 = vcmask 261120
        %v785 = vsel %vm783, %v735, 0
        %v788 = vsel %vm783, %v736, 0
        %v791 = vsel %vm783, %v737, 0
        %v794 = vsel %vm783, %v738, 0
        %v797 = vsel %vm783, %v739, 0
        %v800 = vsel %vm783, %v740, 0
        %v803 = vsel %vm783, %v741, 0
        %v806 = vsel %vm783, %v742, 0
        %v809 = vsel %vm783, %v743, 0
        %v812 = vsel %vm783, %v744, 0
        %v815 = vsel %vm783, %v745, 0
        %v818 = vsel %vm783, %v746, 0
        %v821 = vsel %vm783, %v747, 0
        %v824 = vsel %vm783, %v748, 0
        %v827 = vsel %vm783, %v749, 0
        %v830 = vsel %vm783, %v750, 0
        %v833 = vsel %vm783, %v751, 0
        %v836 = vsel %vm783, %v752, 0
        %v839 = vsel %vm783, %v753, 0
        %v842 = vsel %vm783, %v754, 0
        %v845 = vsel %vm783, %v755, 0
        %v848 = vsel %vm783, %v756, 0
        %v851 = vsel %vm783, %v757, 0
        %v854 = vsel %vm783, %v758, 0
        %v857 = vsel %vm783, %v759, 0
        %v860 = vsel %vm783, %v760, 0
        %v863 = vsel %vm783, %v761, 0
        %v866 = vsel %vm783, %v762, 0
        %v869 = vsel %vm783, %v763, 0
        %v872 = vsel %vm783, %v764, 0
        %v875 = vsel %vm783, %v765, 0
        %v878 = vsel %vm783, %v766, 0
        %880 = vmatprep.subr.bf16.mxu0 0
        %881 = vmatpush1.bf16.msra.mxu0 %v779
        %882 = vmatprep.subr.bf16.mxu0 0
        %883 = vmatpush1.bf16.msra.mxu0 %v780
        %884 = vmatprep.subr.bf16.mxu0 0
        %885 = vmatpush1.bf16.msra.mxu0 0
        %886 = vmatprep.subr.bf16.mxu0 0
        %887 = vmatpush1.bf16.msra.mxu0 0
        %888 = vmatprep.subr.bf16.mxu0 0
        %889 = vmatpush1.bf16.msra.mxu0 0
        %890 = vmatprep.subr.bf16.mxu0 0
        %891 = vmatpush1.bf16.msra.mxu0 0
        %892 = vmatprep.subr.bf16.mxu0 0
        %893 = vmatpush1.bf16.msra.mxu0 0
        %894 = vmatprep.subr.bf16.mxu0 0
        %895 = vmatpush1.bf16.msra.mxu0 0
        %896 = vmatprep.subr.bf16.mxu0 0
        %897 = vmatpush1.bf16.msra.mxu0 0
        %898 = vmatprep.subr.bf16.mxu0 0
        %899 = vmatpush1.bf16.msra.mxu0 0
        %900 = vmatprep.subr.bf16.mxu0 0
        %901 = vmatpush1.bf16.msra.mxu0 0
        %902 = vmatprep.subr.bf16.mxu0 0
        %903 = vmatpush1.bf16.msra.mxu0 0
        %904 = vmatprep.subr.bf16.mxu0 0
        %905 = vmatpush1.bf16.msra.mxu0 0
        %906 = vmatprep.subr.bf16.mxu0 0
        %907 = vmatpush1.bf16.msra.mxu0 0
        %908 = vmatprep.subr.bf16.mxu0 0
        %909 = vmatpush1.bf16.msra.mxu0 0
        %910 = vmatprep.subr.bf16.mxu0 0
        %911 = vmatpush1.bf16.msra.mxu0 0
        %912 = vmatprep.mubr.bf16.mxu0 0
        %913 = vmatmul.mubr.bf16.gmra.mrb[0].mxu0 %v785
        %v914 = vpop.f32.mrb[0].mxu0
        %v915 = vadd.f32 0.0, %v914
        %v916 = vpop.f32.mrb[0].mxu0
        %v917 = vpop.f32.mrb[0].mxu0
        %v918 = vadd.f32 0.0, %v917
        %v919 = vpop.f32.mrb[0].mxu0
        %920 = vmatprep.mubr.bf16.mxu0 0
        %921 = vmatmul.mubr.bf16.gmra.mrb[0].mxu0 %v788
        %v922 = vpop.f32.mrb[0].mxu0
        %v923 = vadd.f32 0.0, %v922
        %v924 = vpop.f32.mrb[0].mxu0
        %v925 = vpop.f32.mrb[0].mxu0
        %v926 = vadd.f32 0.0, %v925
        %v927 = vpop.f32.mrb[0].mxu0
        %928 = vmatprep.mubr.bf16.mxu0 0
        %929 = vmatmul.mubr.bf16.gmra.mrb[0].mxu0 %v791
        %v930 = vpop.f32.mrb[0].mxu0
        %v931 = vadd.f32 0.0, %v930
        %v932 = vpop.f32.mrb[0].mxu0
        %v933 = vpop.f32.mrb[0].mxu0
        %v934 = vadd.f32 0.0, %v933
        %v935 = vpop.f32.mrb[0].mxu0
        %936 = vmatprep.mubr.bf16.mxu0 0
        %937 = vmatmul.mubr.bf16.gmra.mrb[0].mxu0 %v794
        %v938 = vpop.f32.mrb[0].mxu0
        %v939 = vadd.f32 0.0, %v938
        %v940 = vpop.f32.mrb[0].mxu0
        %v941 = vpop.f32.mrb[0].mxu0
        %v942 = vadd.f32 0.0, %v941
        %v943 = vpop.f32.mrb[0].mxu0
        %944 = vmatprep.mubr.bf16.mxu0 0
        %945 = vmatmul.mubr.bf16.gmra.mrb[0].mxu0 %v797
        %v946 = vpop.f32.mrb[0].mxu0
        %v947 = vadd.f32 0.0, %v946
        %v948 = vpop.f32.mrb[0].mxu0
        %v949 = vpop.f32.mrb[0].mxu0
        %v950 = vadd.f32 0.0, %v949
        %v951 = vpop.f32.mrb[0].mxu0
        %952 = vmatprep.mubr.bf16.mxu0 0
        %953 = vmatmul.mubr.bf16.gmra.mrb[0].mxu0 %v800
        %v954 = vpop.f32.mrb[0].mxu0
        %v955 = vadd.f32 0.0, %v954
        %v956 = vpop.f32.mrb[0].mxu0
        %v957 = vpop.f32.mrb[0].mxu0
        %v958 = vadd.f32 0.0, %v957
        %v959 = vpop.f32.mrb[0].mxu0
        %960 = vmatprep.mubr.bf16.mxu0 0
        %961 = vmatmul.mubr.bf16.gmra.mrb[0].mxu0 %v803
        %v962 = vpop.f32.mrb[0].mxu0
        %v963 = vadd.f32 0.0, %v962
        %v964 = vpop.f32.mrb[0].mxu0
        %v965 = vpop.f32.mrb[0].mxu0
        %v966 = vadd.f32 0.0, %v965
        %v967 = vpop.f32.mrb[0].mxu0
        %968 = vmatprep.mubr.bf16.mxu0 0
        %969 = vmatmul.mubr.bf16.gmra.mrb[0].mxu0 %v806
        %v970 = vpop.f32.mrb[0].mxu0
        %v971 = vadd.f32 0.0, %v970
        %v972 = vpop.f32.mrb[0].mxu0
        %v973 = vpop.f32.mrb[0].mxu0
        %v974 = vadd.f32 0.0, %v973
        %v975 = vpop.f32.mrb[0].mxu0
        %976 = vmatprep.mubr.bf16.mxu0 0
        %977 = vmatmul.mubr.bf16.gmra.mrb[0].mxu0 %v809
        %v978 = vpop.f32.mrb[0].mxu0
        %v979 = vadd.f32 0.0, %v978
        %v980 = vpop.f32.mrb[0].mxu0
        %v981 = vpop.f32.mrb[0].mxu0
        %v982 = vadd.f32 0.0, %v981
        %v983 = vpop.f32.mrb[0].mxu0
        %984 = vmatprep.mubr.bf16.mxu0 0
        %985 = vmatmul.mubr.bf16.gmra.mrb[0].mxu0 %v812
        %v986 = vpop.f32.mrb[0].mxu0
        %v987 = vadd.f32 0.0, %v986
        %v988 = vpop.f32.mrb[0].mxu0
        %v989 = vpop.f32.mrb[0].mxu0
        %v990 = vadd.f32 0.0, %v989
        %v991 = vpop.f32.mrb[0].mxu0
        %992 = vmatprep.mubr.bf16.mxu0 0
        %993 = vmatmul.mubr.bf16.gmra.mrb[0].mxu0 %v815
        %v994 = vpop.f32.mrb[0].mxu0
        %v995 = vadd.f32 0.0, %v994
        %v996 = vpop.f32.mrb[0].mxu0
        %v997 = vpop.f32.mrb[0].mxu0
        %v998 = vadd.f32 0.0, %v997
        %v999 = vpop.f32.mrb[0].mxu0
        %1000 = vmatprep.mubr.bf16.mxu0 0
        %1001 = vmatmul.mubr.bf16.gmra.mrb[0].mxu0 %v818
        %v1002 = vpop.f32.mrb[0].mxu0
        %v1003 = vadd.f32 0.0, %v1002
        %v1004 = vpop.f32.mrb[0].mxu0
        %v1005 = vpop.f32.mrb[0].mxu0
        %v1006 = vadd.f32 0.0, %v1005
        %v1007 = vpop.f32.mrb[0].mxu0
        %1008 = vmatprep.mubr.bf16.mxu0 0
        %1009 = vmatmul.mubr.bf16.gmra.mrb[0].mxu0 %v821
        %v1010 = vpop.f32.mrb[0].mxu0
        %v1011 = vadd.f32 0.0, %v1010
        %v1012 = vpop.f32.mrb[0].mxu0
        %v1013 = vpop.f32.mrb[0].mxu0
        %v1014 = vadd.f32 0.0, %v1013
        %v1015 = vpop.f32.mrb[0].mxu0
        %1016 = vmatprep.mubr.bf16.mxu0 0
        %1017 = vmatmul.mubr.bf16.gmra.mrb[0].mxu0 %v824
        %v1018 = vpop.f32.mrb[0].mxu0
        %v1019 = vadd.f32 0.0, %v1018
        %v1020 = vpop.f32.mrb[0].mxu0
        %v1021 = vpop.f32.mrb[0].mxu0
        %v1022 = vadd.f32 0.0, %v1021
        %v1023 = vpop.f32.mrb[0].mxu0
        %1024 = vmatprep.mubr.bf16.mxu0 0
        %1025 = vmatmul.mubr.bf16.gmra.mrb[0].mxu0 %v827
        %v1026 = vpop.f32.mrb[0].mxu0
        %v1027 = vadd.f32 0.0, %v1026
        %v1028 = vpop.f32.mrb[0].mxu0
        %v1029 = vpop.f32.mrb[0].mxu0
        %v1030 = vadd.f32 0.0, %v1029
        %v1031 = vpop.f32.mrb[0].mxu0
        %1032 = vmatprep.mubr.bf16.mxu0 0
        %1033 = vmatmul.mubr.bf16.gmra.mrb[0].mxu0 %v830
        %v1034 = vpop.f32.mrb[0].mxu0
        %v1035 = vadd.f32 0.0, %v1034
        %v1036 = vpop.f32.mrb[0].mxu0
        %v1037 = vpop.f32.mrb[0].mxu0
        %v1038 = vadd.f32 0.0, %v1037
        %v1039 = vpop.f32.mrb[0].mxu0
        %1040 = vmatprep.mubr.bf16.mxu0 0
        %1041 = vmatmul.mubr.bf16.gmra.mrb[0].mxu0 %v833
        %v1042 = vpop.f32.mrb[0].mxu0
        %v1043 = vadd.f32 0.0, %v1042
        %v1044 = vpop.f32.mrb[0].mxu0
        %v1045 = vpop.f32.mrb[0].mxu0
        %v1046 = vadd.f32 0.0, %v1045
        %v1047 = vpop.f32.mrb[0].mxu0
        %1048 = vmatprep.mubr.bf16.mxu0 0
        %1049 = vmatmul.mubr.bf16.gmra.mrb[0].mxu0 %v836
        %v1050 = vpop.f32.mrb[0].mxu0
        %v1051 = vadd.f32 0.0, %v1050
        %v1052 = vpop.f32.mrb[0].mxu0
        %v1053 = vpop.f32.mrb[0].mxu0
        %v1054 = vadd.f32 0.0, %v1053
        %v1055 = vpop.f32.mrb[0].mxu0
        %1056 = vmatprep.mubr.bf16.mxu0 0
        %1057 = vmatmul.mubr.bf16.gmra.mrb[0].mxu0 %v839
        %v1058 = vpop.f32.mrb[0].mxu0
        %v1059 = vadd.f32 0.0, %v1058
        %v1060 = vpop.f32.mrb[0].mxu0
        %v1061 = vpop.f32.mrb[0].mxu0
        %v1062 = vadd.f32 0.0, %v1061
        %v1063 = vpop.f32.mrb[0].mxu0
        %1064 = vmatprep.mubr.bf16.mxu0 0
        %1065 = vmatmul.mubr.bf16.gmra.mrb[0].mxu0 %v842
        %v1066 = vpop.f32.mrb[0].mxu0
        %v1067 = vadd.f32 0.0, %v1066
        %v1068 = vpop.f32.mrb[0].mxu0
        %v1069 = vpop.f32.mrb[0].mxu0
        %v1070 = vadd.f32 0.0, %v1069
        %v1071 = vpop.f32.mrb[0].mxu0
        %1072 = vmatprep.mubr.bf16.mxu0 0
        %1073 = vmatmul.mubr.bf16.gmra.mrb[0].mxu0 %v845
        %v1074 = vpop.f32.mrb[0].mxu0
        %v1075 = vadd.f32 0.0, %v1074
        %v1076 = vpop.f32.mrb[0].mxu0
        %v1077 = vpop.f32.mrb[0].mxu0
        %v1078 = vadd.f32 0.0, %v1077
        %v1079 = vpop.f32.mrb[0].mxu0
        %1080 = vmatprep.mubr.bf16.mxu0 0
        %1081 = vmatmul.mubr.bf16.gmra.mrb[0].mxu0 %v848
        %v1082 = vpop.f32.mrb[0].mxu0
        %v1083 = vadd.f32 0.0, %v1082
        %v1084 = vpop.f32.mrb[0].mxu0
        %v1085 = vpop.f32.mrb[0].mxu0
        %v1086 = vadd.f32 0.0, %v1085
        %v1087 = vpop.f32.mrb[0].mxu0
        %1088 = vmatprep.mubr.bf16.mxu0 0
        %1089 = vmatmul.mubr.bf16.gmra.mrb[0].mxu0 %v851
        %v1090 = vpop.f32.mrb[0].mxu0
        %v1091 = vadd.f32 0.0, %v1090
        %v1092 = vpop.f32.mrb[0].mxu0
        %v1093 = vpop.f32.mrb[0].mxu0
        %v1094 = vadd.f32 0.0, %v1093
        %v1095 = vpop.f32.mrb[0].mxu0
        %1096 = vmatprep.mubr.bf16.mxu0 0
        %1097 = vmatmul.mubr.bf16.gmra.mrb[0].mxu0 %v854
        %v1098 = vpop.f32.mrb[0].mxu0
        %v1099 = vadd.f32 0.0, %v1098
        %v1100 = vpop.f32.mrb[0].mxu0
        %v1101 = vpop.f32.mrb[0].mxu0
        %v1102 = vadd.f32 0.0, %v1101
        %v1103 = vpop.f32.mrb[0].mxu0
        %1104 = vmatprep.mubr.bf16.mxu0 0
        %1105 = vmatmul.mubr.bf16.gmra.mrb[0].mxu0 %v857
        %v1106 = vpop.f32.mrb[0].mxu0
        %v1107 = vadd.f32 0.0, %v1106
        %v1108 = vpop.f32.mrb[0].mxu0
        %v1109 = vpop.f32.mrb[0].mxu0
        %v1110 = vadd.f32 0.0, %v1109
        %v1111 = vpop.f32.mrb[0].mxu0
        %1112 = vmatprep.mubr.bf16.mxu0 0
        %1113 = vmatmul.mubr.bf16.gmra.mrb[0].mxu0 %v860
        %v1114 = vpop.f32.mrb[0].mxu0
        %v1115 = vadd.f32 0.0, %v1114
        %v1116 = vpop.f32.mrb[0].mxu0
        %v1117 = vpop.f32.mrb[0].mxu0
        %v1118 = vadd.f32 0.0, %v1117
        %v1119 = vpop.f32.mrb[0].mxu0
        %1120 = vmatprep.mubr.bf16.mxu0 0
        %1121 = vmatmul.mubr.bf16.gmra.mrb[0].mxu0 %v863
        %v1122 = vpop.f32.mrb[0].mxu0
        %v1123 = vadd.f32 0.0, %v1122
        %v1124 = vpop.f32.mrb[0].mxu0
        %v1125 = vpop.f32.mrb[0].mxu0
        %v1126 = vadd.f32 0.0, %v1125
        %v1127 = vpop.f32.mrb[0].mxu0
        %1128 = vmatprep.mubr.bf16.mxu0 0
        %1129 = vmatmul.mubr.bf16.gmra.mrb[0].mxu0 %v866
        %v1130 = vpop.f32.mrb[0].mxu0
        %v1131 = vadd.f32 0.0, %v1130
        %v1132 = vpop.f32.mrb[0].mxu0
        %v1133 = vpop.f32.mrb[0].mxu0
        %v1134 = vadd.f32 0.0, %v1133
        %v1135 = vpop.f32.mrb[0].mxu0
        %1136 = vmatprep.mubr.bf16.mxu0 0
        %1137 = vmatmul.mubr.bf16.gmra.mrb[0].mxu0 %v869
        %v1138 = vpop.f32.mrb[0].mxu0
        %v1139 = vadd.f32 0.0, %v1138
        %v1140 = vpop.f32.mrb[0].mxu0
        %v1141 = vpop.f32.mrb[0].mxu0
        %v1142 = vadd.f32 0.0, %v1141
        %v1143 = vpop.f32.mrb[0].mxu0
        %1144 = vmatprep.mubr.bf16.mxu0 0
        %1145 = vmatmul.mubr.bf16.gmra.mrb[0].mxu0 %v872
        %v1146 = vpop.f32.mrb[0].mxu0
        %v1147 = vadd.f32 0.0, %v1146
        %v1148 = vpop.f32.mrb[0].mxu0
        %v1149 = vpop.f32.mrb[0].mxu0
        %v1150 = vadd.f32 0.0, %v1149
        %v1151 = vpop.f32.mrb[0].mxu0
        %1152 = vmatprep.mubr.bf16.mxu0 0
        %1153 = vmatmul.mubr.bf16.gmra.mrb[0].mxu0 %v875
        %v1154 = vpop.f32.mrb[0].mxu0
        %v1155 = vadd.f32 0.0, %v1154
        %v1156 = vpop.f32.mrb[0].mxu0
        %v1157 = vpop.f32.mrb[0].mxu0
        %v1158 = vadd.f32 0.0, %v1157
        %v1159 = vpop.f32.mrb[0].mxu0
        %1160 = vmatprep.mubr.bf16.mxu0 0
        %1161 = vmatmul.mubr.bf16.gmra.mrb[0].mxu0 %v878
        %v1162 = vpop.f32.mrb[0].mxu0
        %v1163 = vadd.f32 0.0, %v1162
        %v1164 = vpop.f32.mrb[0].mxu0
        %v1165 = vpop.f32.mrb[0].mxu0
        %v1166 = vadd.f32 0.0, %v1165
        %v1167 = vpop.f32.mrb[0].mxu0
        %1168 = vdwg.mxu0
        %v1169 = vadd.f32 %v671, %v915
        %v1170 = vadd.f32 %v672, %v918
        %v1171 = vadd.f32 %v673, %v923
        %v1172 = vadd.f32 %v674, %v926
        %v1173 = vadd.f32 %v675, %v931
        %v1174 = vadd.f32 %v676, %v934
        %v1175 = vadd.f32 %v677, %v939
        %v1176 = vadd.f32 %v678, %v942
        %v1177 = vadd.f32 %v679, %v947
        %v1178 = vadd.f32 %v680, %v950
        %v1179 = vadd.f32 %v681, %v955
        %v1180 = vadd.f32 %v682, %v958
        %v1181 = vadd.f32 %v683, %v963
        %v1182 = vadd.f32 %v684, %v966
        %v1183 = vadd.f32 %v685, %v971
        %v1184 = vadd.f32 %v686, %v974
        %v1185 = vadd.f32 %v687, %v979
        %v1186 = vadd.f32 %v688, %v982
        %v1187 = vadd.f32 %v689, %v987
        %v1188 = vadd.f32 %v690, %v990
        %v1189 = vadd.f32 %v691, %v995
        %v1190 = vadd.f32 %v692, %v998
        %v1191 = vadd.f32 %v693, %v1003
        %v1192 = vadd.f32 %v694, %v1006
        %v1193 = vadd.f32 %v695, %v1011
        %v1194 = vadd.f32 %v696, %v1014
        %v1195 = vadd.f32 %v697, %v1019
        %v1196 = vadd.f32 %v698, %v1022
        %v1197 = vadd.f32 %v699, %v1027
        %v1198 = vadd.f32 %v700, %v1030
        %v1199 = vadd.f32 %v701, %v1035
        %v1200 = vadd.f32 %v702, %v1038
        %v1201 = vadd.f32 %v703, %v1043
        %v1202 = vadd.f32 %v704, %v1046
        %v1203 = vadd.f32 %v705, %v1051
        %v1204 = vadd.f32 %v706, %v1054
        %v1205 = vadd.f32 %v707, %v1059
        %v1206 = vadd.f32 %v708, %v1062
        %v1207 = vadd.f32 %v709, %v1067
        %v1208 = vadd.f32 %v710, %v1070
        %v1209 = vadd.f32 %v711, %v1075
        %v1210 = vadd.f32 %v712, %v1078
        %v1211 = vadd.f32 %v713, %v1083
        %v1212 = vadd.f32 %v714, %v1086
        %v1213 = vadd.f32 %v715, %v1091
        %v1214 = vadd.f32 %v716, %v1094
        %v1215 = vadd.f32 %v717, %v1099
        %v1216 = vadd.f32 %v718, %v1102
        %v1217 = vadd.f32 %v719, %v1107
        %v1218 = vadd.f32 %v720, %v1110
        %v1219 = vadd.f32 %v721, %v1115
        %v1220 = vadd.f32 %v722, %v1118
        %v1221 = vadd.f32 %v723, %v1123
        %v1222 = vadd.f32 %v724, %v1126
        %v1223 = vadd.f32 %v725, %v1131
        %v1224 = vadd.f32 %v726, %v1134
        %v1225 = vadd.f32 %v727, %v1139
        %v1226 = vadd.f32 %v728, %v1142
        %v1227 = vadd.f32 %v729, %v1147
        %v1228 = vadd.f32 %v730, %v1150
        %v1229 = vadd.f32 %v731, %v1155
        %v1230 = vadd.f32 %v732, %v1158
        %v1231 = vadd.f32 %v733, %v1163
        %v1232 = vadd.f32 %v734, %v1166
        %vm1233 = vcmask 523264
        %1234 = vst.msk [vmem:[%s294] sm:$0xff] %vm1233, %v1169
        %1235 = vst.msk [vmem:[%s294 + $0x8] sm:$0xff] %vm1233, %v1170
        %1236 = vst.msk [vmem:[%s294 + $0x10] sm:$0xff] %vm1233, %v1171
        %1237 = vst.msk [vmem:[%s294 + $0x18] sm:$0xff] %vm1233, %v1172
        %1238 = vst.msk [vmem:[%s294 + $0x20] sm:$0xff] %vm1233, %v1173
        %1239 = vst.msk [vmem:[%s294 + $0x28] sm:$0xff] %vm1233, %v1174
        %1240 = vst.msk [vmem:[%s294 + $0x30] sm:$0xff] %vm1233, %v1175
        %1241 = vst.msk [vmem:[%s294 + $0x38] sm:$0xff] %vm1233, %v1176
        %1242 = vst.msk [vmem:[%s294 + $0x40] sm:$0xff] %vm1233, %v1177
        %1243 = vst.msk [vmem:[%s294 + $0x48] sm:$0xff] %vm1233, %v1178
        %1244 = vst.msk [vmem:[%s294 + $0x50] sm:$0xff] %vm1233, %v1179
        %1245 = vst.msk [vmem:[%s294 + $0x58] sm:$0xff] %vm1233, %v1180
        %1246 = vst.msk [vmem:[%s294 + $0x60] sm:$0xff] %vm1233, %v1181
        %1247 = vst.msk [vmem:[%s294 + $0x68] sm:$0xff] %vm1233, %v1182
        %1248 = vst.msk [vmem:[%s294 + $0x70] sm:$0xff] %vm1233, %v1183
        %1249 = vst.msk [vmem:[%s294 + $0x78] sm:$0xff] %vm1233, %v1184
        %1250 = vst.msk [vmem:[%s294 + $0x80] sm:$0xff] %vm1233, %v1185
        %1251 = vst.msk [vmem:[%s294 + $0x88] sm:$0xff] %vm1233, %v1186
        %1252 = vst.msk [vmem:[%s294 + $0x90] sm:$0xff] %vm1233, %v1187
        %1253 = vst.msk [vmem:[%s294 + $0x98] sm:$0xff] %vm1233, %v1188
        %1254 = vst.msk [vmem:[%s294 + $0xa0] sm:$0xff] %vm1233, %v1189
        %1255 = vst.msk [vmem:[%s294 + $0xa8] sm:$0xff] %vm1233, %v1190
        %1256 = vst.msk [vmem:[%s294 + $0xb0] sm:$0xff] %vm1233, %v1191
        %1257 = vst.msk [vmem:[%s294 + $0xb8] sm:$0xff] %vm1233, %v1192
        %1258 = vst.msk [vmem:[%s294 + $0xc0] sm:$0xff] %vm1233, %v1193
        %1259 = vst.msk [vmem:[%s294 + $0xc8] sm:$0xff] %vm1233, %v1194
        %1260 = vst.msk [vmem:[%s294 + $0xd0] sm:$0xff] %vm1233, %v1195
        %1261 = vst.msk [vmem:[%s294 + $0xd8] sm:$0xff] %vm1233, %v1196
        %1262 = vst.msk [vmem:[%s294 + $0xe0] sm:$0xff] %vm1233, %v1197
        %1263 = vst.msk [vmem:[%s294 + $0xe8] sm:$0xff] %vm1233, %v1198
        %1264 = vst.msk [vmem:[%s294 + $0xf0] sm:$0xff] %vm1233, %v1199
        %1265 = vst.msk [vmem:[%s294 + $0xf8] sm:$0xff] %vm1233, %v1200
        %1266 = vst.msk [vmem:[%s294 + $0x100] sm:$0xff] %vm1233, %v1201
        %1267 = vst.msk [vmem:[%s294 + $0x108] sm:$0xff] %vm1233, %v1202
        %1268 = vst.msk [vmem:[%s294 + $0x110] sm:$0xff] %vm1233, %v1203
        %1269 = vst.msk [vmem:[%s294 + $0x118] sm:$0xff] %vm1233, %v1204
        %1270 = vst.msk [vmem:[%s294 + $0x120] sm:$0xff] %vm1233, %v1205
        %1271 = vst.msk [vmem:[%s294 + $0x128] sm:$0xff] %vm1233, %v1206
        %1272 = vst.msk [vmem:[%s294 + $0x130] sm:$0xff] %vm1233, %v1207
        %1273 = vst.msk [vmem:[%s294 + $0x138] sm:$0xff] %vm1233, %v1208
        %1274 = vst.msk [vmem:[%s294 + $0x140] sm:$0xff] %vm1233, %v1209
        %1275 = vst.msk [vmem:[%s294 + $0x148] sm:$0xff] %vm1233, %v1210
        %1276 = vst.msk [vmem:[%s294 + $0x150] sm:$0xff] %vm1233, %v1211
        %1277 = vst.msk [vmem:[%s294 + $0x158] sm:$0xff] %vm1233, %v1212
        %1278 = vst.msk [vmem:[%s294 + $0x160] sm:$0xff] %vm1233, %v1213
        %1279 = vst.msk [vmem:[%s294 + $0x168] sm:$0xff] %vm1233, %v1214
        %1280 = vst.msk [vmem:[%s294 + $0x170] sm:$0xff] %vm1233, %v1215
        %1281 = vst.msk [vmem:[%s294 + $0x178] sm:$0xff] %vm1233, %v1216
        %1282 = vst.msk [vmem:[%s294 + $0x180] sm:$0xff] %vm1233, %v1217
        %1283 = vst.msk [vmem:[%s294 + $0x188] sm:$0xff] %vm1233, %v1218
        %1284 = vst.msk [vmem:[%s294 + $0x190] sm:$0xff] %vm1233, %v1219
        %1285 = vst.msk [vmem:[%s294 + $0x198] sm:$0xff] %vm1233, %v1220
        %1286 = vst.msk [vmem:[%s294 + $0x1a0] sm:$0xff] %vm1233, %v1221
        %1287 = vst.msk [vmem:[%s294 + $0x1a8] sm:$0xff] %vm1233, %v1222
        %1288 = vst.msk [vmem:[%s294 + $0x1b0] sm:$0xff] %vm1233, %v1223
        %1289 = vst.msk [vmem:[%s294 + $0x1b8] sm:$0xff] %vm1233, %v1224
        %1290 = vst.msk [vmem:[%s294 + $0x1c0] sm:$0xff] %vm1233, %v1225
        %1291 = vst.msk [vmem:[%s294 + $0x1c8] sm:$0xff] %vm1233, %v1226
        %1292 = vst.msk [vmem:[%s294 + $0x1d0] sm:$0xff] %vm1233, %v1227
        %1293 = vst.msk [vmem:[%s294 + $0x1d8] sm:$0xff] %vm1233, %v1228
        %1294 = vst.msk [vmem:[%s294 + $0x1e0] sm:$0xff] %vm1233, %v1229
        %1295 = vst.msk [vmem:[%s294 + $0x1e8] sm:$0xff] %vm1233, %v1230
        %1296 = vst.msk [vmem:[%s294 + $0x1f0] sm:$0xff] %vm1233, %v1231
        %1297 = vst.msk [vmem:[%s294 + $0x1f8] sm:$0xff] %vm1233, %v1232
        %s1298 = sand.u32 %s161, 1
        %s1299 = scalar_lea.sflag [#allocation3], %s1298
        %s1300 = sand.u32 %s161, 1
        %s1301 = smul.addr %s1300, 512
        %s1302 = scalar_lea.vmem [#allocation2], %s1301
        // Predicated region
        $region41: #{bn_ac_conv3d.3} parent=35 // pred_check
          %p1303 = pneg %p171
        $region42: #{bn_ac_conv3d.3} parent=35 // pred_check_branch
          %1305 = sbr.rel (%p1303) target = $region44
        $region43: #{bn_ac_conv3d.3} parent=35 // pred_region
          %s1306 = smul.u32 64, %s24
          %s1308 = ssub.s32 8192, 8192
          %1309 = vsyncadd %s1299, %s1308
          %s1310 = smul.addr %s23, 512
          %s1311 = sadd.s32 %s1306, %s1310
          %s1312 = smul.addr %s1311, 128
          %s1313 = scalar_lea.hbm %s4, %s1312
          %s1314 = sshll.u32 %s1302, 4
          %s1315 = int_to_ptr.vmem [resolvable:$true] %s1314
          %1320 = dma.vmem_to_hbm [thread:$0]  %s1315, 8192, %s1313, %s1299, 128, 128, 8
        $region44: #{bn_ac_conv3d.3} parent=35 // pred_fallthru
          _
      $region36: #{bn_ac_conv3d.3} parent=5 // pred_fallthru
        _
      %p1321 = scmp.le.s32.totalorder 2, %s13
      // Predicated region
      $region45: #{bn_ac_conv3d.3} parent=5 // pred_check
        %p1322 = pneg %p1321
      $region46: #{bn_ac_conv3d.3} parent=5 // pred_check_branch
        %1324 = sbr.rel (%p1322) target = $region48
      $region47: #{bn_ac_conv3d.3} parent=5 // pred_region
        %s1325 = ssub.s32 %s13, 2
        // Predicated region
        $region49: #{bn_ac_conv3d.3} parent=47 // pred_check
          %p1326 = pneg %p177
        $region50: #{bn_ac_conv3d.3} parent=47 // pred_check_branch
          %1328 = sbr.rel (%p1326) target = $region52
        $region51: #{bn_ac_conv3d.3} parent=47 // pred_region
          %s1329 = sand.u32 %s162, 1
          %s1330 = scalar_lea.sflag [#allocation3], %s1329
          %s1331 = sand.u32 %s162, 1
          %s1332 = smul.addr %s1331, 512
          %s1333 = scalar_lea.vmem [#allocation2], %s1332
          %1334 = dma.done %s1330, 8192
        $region52: #{bn_ac_conv3d.3} parent=47 // pred_fallthru
          _
      $region48: #{bn_ac_conv3d.3} parent=5 // pred_fallthru
        _
    $region6: #{bn_ac_conv3d.3} parent=1 // loop_footer
      %s17 = sadd.s32 1, %s13
    $region7: #{bn_ac_conv3d.3} parent=1 // loop_footer_branch
      %12 = sbr.rel target = $region3
    $region8: #{bn_ac_conv3d.3} parent=1 // loop_exit
      _
    %1335 = vsyncpa [#allocation3], 1
    %s1336 = scalar_lea.sflag [#allocation3], 1
    %1337 = vsyncpa %s1336, 1

</llo_original>
